<compile_context>
chip_gen: v5e
topology: v5e:2x2
jax: 0.10.0
libtpu: 0.0.40
codegen_flags: <defaults>
</compile_context>

<pallas_src>
import jax
import jax.numpy as jnp
from jax.experimental import pallas as pl
from jax.experimental.pallas import tpu as pltpu  # noqa: F401  (kept for TPU-specific knobs)


# ----------------------------------------------------------------------------
# Fused kernel factory: stacked LSTM (packed gates [i|f|g|o]) + ReLU MLP head.
# ----------------------------------------------------------------------------
def _make_fused_kernel(T, Bp, H, num_layers):
    def kernel(*refs):
        # refs = [x2d, (wi, wh, b) * num_layers, w1t, b1, w2t, b2, out]
        x_ref = refs[0]
        layer_refs = [refs[1 + 3 * l: 4 + 3 * l] for l in range(num_layers)]
        base = 1 + 3 * num_layers
        w1_ref, b1_ref, w2_ref, b2_ref, o_ref = refs[base:base + 5]

        # Hoist ALL weight/bias loads out of the recurrence (read once, reuse T times).
        wi = [r[...] for (r, _, _) in layer_refs]      # (in_l, 4H) packed, lane-dense
        wh = [r[...] for (_, r, _) in layer_refs]      # (H, 4H)  packed, lane-dense
        bias = [r[...] for (_, _, r) in layer_refs]    # (1, 4H)  fused b_ih + b_hh

        # Layer-0 input projection for ALL timesteps: one lane-dense matmul +
        # one broadcast bias add (only the W_hh product is truly sequential).
        xproj0 = (jnp.dot(x_ref[...], wi[0], preferred_element_type=jnp.float32)
                  + bias[0])                            # (T*Bp, 4H)

        h = [jnp.zeros((Bp, H), jnp.float32) for _ in range(num_layers)]
        c = [jnp.zeros((Bp, H), jnp.float32) for _ in range(num_layers)]

        def gate_update(gates, c_prev):
            # 3 EUP ops per step: sigmoid over the full 128-lane block,
            # tanh on the 32-lane g slice, tanh on c.  Lane slices are static.
            sg = jax.nn.sigmoid(gates)                  # (Bp, 4H)
            i_g = sg[:, 0:H]
            f_g = sg[:, H:2 * H]
            o_g = sg[:, 3 * H:4 * H]
            g_g = jnp.tanh(gates[:, 2 * H:3 * H])
            c_new = f_g * c_prev + i_g * g_g
            h_new = o_g * jnp.tanh(c_new)
            return h_new, c_new

        # Wavefront over super-steps: layer l processes timestep t = step - l.
        # Iterating l from high to low means h[l-1] still holds layer (l-1)'s
        # output at exactly timestep t when layer l consumes it.
        for step in range(T + num_layers - 1):
            for l in range(num_layers - 1, -1, -1):
                t = step - l
                if not (0 <= t < T):
                    continue
                if l == 0:
                    xp = xproj0[t * Bp:(t + 1) * Bp]    # static (Bp, 4H) slice
                else:
                    # Per-step input projection fed directly from the lower
                    # layer's h (no inter-layer VMEM/HBM round trip).
                    xp = (jnp.dot(h[l - 1], wi[l],
                                  preferred_element_type=jnp.float32) + bias[l])
                gates = xp + jnp.dot(h[l], wh[l],
                                     preferred_element_type=jnp.float32)
                h[l], c[l] = gate_update(gates, c[l])

        # MLP head on the last layer's final hidden state: relu(fc1) -> relu(fc2).
        z1 = jnp.maximum(
            jnp.dot(h[-1], w1_ref[...], preferred_element_type=jnp.float32)
            + b1_ref[...], 0.0)
        z2 = jnp.maximum(
            jnp.dot(z1, w2_ref[...], preferred_element_type=jnp.float32)
            + b2_ref[...], 0.0)
        o_ref[...] = z2.astype(o_ref.dtype)             # (Bp, 1); sliced outside

    return kernel


# ----------------------------------------------------------------------------
# One-time parameter preprocessing: packed lane-dense gate slabs + fused bias.
# PyTorch gate row order [i, f, g, o]  ->  packed column order [i | f | g | o].
# ----------------------------------------------------------------------------
def prepare_params(params):
    prep = {"layers": []}
    for layer in params["lstm"]:
        w_ih = jnp.asarray(layer["w_ih"], jnp.float32)      # (4H, in)
        w_hh = jnp.asarray(layer["w_hh"], jnp.float32)      # (4H, H)
        wi = w_ih.T                                          # (in, 4H) packed
        wh = w_hh.T                                          # (H, 4H)  packed
        bg = (jnp.asarray(layer["b_ih"], jnp.float32)
              + jnp.asarray(layer["b_hh"], jnp.float32))[None, :]   # (1, 4H)
        prep["layers"].append((wi, wh, bg))
    prep["w1t"] = jnp.asarray(params["fc1_w"], jnp.float32).T        # (H, 64)
    prep["b1"] = jnp.asarray(params["fc1_b"], jnp.float32)[None, :]  # (1, 64)
    prep["w2t"] = jnp.asarray(params["fc2_w"], jnp.float32).T        # (64, 1)
    prep["b2"] = jnp.asarray(params["fc2_b"], jnp.float32)[None, :]  # (1, 1)
    return prep


# ----------------------------------------------------------------------------
# Full model forward: single fused pallas_call (grid-less, everything in VMEM).
# ----------------------------------------------------------------------------
def lstm_model_forward(x_btI, prep):
    """x_btI: (B, T, input_size), matching PyTorch batch_first layout."""
    B, T, I = x_btI.shape
    num_layers = len(prep["layers"])
    H = prep["layers"][0][1].shape[0]       # packed wh is (H, 4H)
    F2 = prep["w2t"].shape[1]
    Bp = ((B + 7) // 8) * 8                 # pad batch to a full sublane group

    # time-major, batch-padded, flattened to (T*Bp, I) for the batched x-proj
    x_tbi = jnp.transpose(x_btI.astype(jnp.float32), (1, 0, 2))    # (T, B, I)
    x_pad = jnp.pad(x_tbi, ((0, 0), (0, Bp - B), (0, 0)))          # (T, Bp, I)
    x2d = x_pad.reshape(T * Bp, I)

    kernel = _make_fused_kernel(T, Bp, H, num_layers)

    in_arrays = [x2d]
    in_specs = [pl.BlockSpec(x2d.shape, lambda: (0, 0))]
    for (wi, wh, bg) in prep["layers"]:
        in_arrays += [wi, wh, bg]
        in_specs += [pl.BlockSpec(wi.shape, lambda: (0, 0)),
                     pl.BlockSpec(wh.shape, lambda: (0, 0)),
                     pl.BlockSpec(bg.shape, lambda: (0, 0))]
    in_arrays += [prep["w1t"], prep["b1"], prep["w2t"], prep["b2"]]
    in_specs += [pl.BlockSpec(prep["w1t"].shape, lambda: (0, 0)),
                 pl.BlockSpec(prep["b1"].shape, lambda: (0, 0)),
                 pl.BlockSpec(prep["w2t"].shape, lambda: (0, 0)),
                 pl.BlockSpec(prep["b2"].shape, lambda: (0, 0))]

    out_pad = pl.pallas_call(
        kernel,
        out_shape=jax.ShapeDtypeStruct((Bp, F2), jnp.float32),
        in_specs=in_specs,
        out_specs=pl.BlockSpec((Bp, F2), lambda: (0, 0)),
    )(*in_arrays)
    return out_pad[:B]                       # drop padded batch rows


# ----------------------------------------------------------------------------
# Deterministic parameter init (mirrors LSTM_Model.init_weights semantics):
#  - LSTM weights ~ N(0, 0.1), LSTM biases = 0
#  - Linear weights ~ U(-1e-4, 1e-4), Linear biases = 0
# ----------------------------------------------------------------------------
def init_params(key, input_size, hidden_size, num_layers):
    params = {"lstm": []}
    H = hidden_size
    for l in range(num_layers):
        key, k1, k2 = jax.random.split(key, 3)
        in_sz = input_size if l == 0 else H
        params["lstm"].append({
            "w_ih": 0.1 * jax.random.normal(k1, (4 * H, in_sz), jnp.float32),
            "w_hh": 0.1 * jax.random.normal(k2, (4 * H, H), jnp.float32),
            "b_ih": jnp.zeros((4 * H,), jnp.float32),
            "b_hh": jnp.zeros((4 * H,), jnp.float32),
        })
    key, k3, k4 = jax.random.split(key, 3)
    params["fc1_w"] = jax.random.uniform(k3, (64, H), jnp.float32,
                                         minval=-1e-4, maxval=1e-4)
    params["fc1_b"] = jnp.zeros((64,), jnp.float32)
    params["fc2_w"] = jax.random.uniform(k4, (1, 64), jnp.float32,
                                         minval=-1e-4, maxval=1e-4)
    params["fc2_b"] = jnp.zeros((1,), jnp.float32)
    return params


# Pure-JAX reference (for correctness check only).
def _reference_forward(x_btI, params):
    x = jnp.transpose(x_btI, (1, 0, 2)).astype(jnp.float32)  # (T, B, I)
    for layer in params["lstm"]:
        H = layer["w_hh"].shape[1]
        B = x.shape[1]

        def step(carry, x_t):
            h, c = carry
            gates = (x_t @ layer["w_ih"].T + h @ layer["w_hh"].T
                     + layer["b_ih"] + layer["b_hh"])
            i, f, g, o = jnp.split(gates, 4, axis=-1)
            c = jax.nn.sigmoid(f) * c + jax.nn.sigmoid(i) * jnp.tanh(g)
            h = jax.nn.sigmoid(o) * jnp.tanh(c)
            return (h, c), h

        init = (jnp.zeros((B, H), jnp.float32), jnp.zeros((B, H), jnp.float32))
        _, x = jax.lax.scan(step, init, x)
    h_last = x[-1]
    z1 = jnp.maximum(h_last @ params["fc1_w"].T + params["fc1_b"], 0.0)
    return jnp.maximum(z1 @ params["fc2_w"].T + params["fc2_b"], 0.0)


if __name__ == "__main__":
    B, T, INPUT, HIDDEN, LAYERS = 2, 8, 16, 32, 2

    key = jax.random.PRNGKey(0)
    key, kx = jax.random.split(key)
    x = jax.random.normal(kx, (B, T, INPUT), jnp.float32)   # (B, T, input_size)

    params = init_params(key, INPUT, HIDDEN, LAYERS)
    prep = prepare_params(params)          # one-time weight packing/transposes

    fwd = jax.jit(lstm_model_forward)
    out = jax.block_until_ready(fwd(x, prep))                # (B, 1)

    ref = _reference_forward(x, params)
    assert out.shape == (B, 1)
    assert jnp.allclose(out, ref, atol=1e-4, rtol=1e-4)

    print("KERNEL_OK")
</pallas_src>

<mosaic_0001>
module attributes {stable_mosaic.version = 11 : i64} {
  func.func @kernel(%arg0: memref<64x16xf32, #tpu.memory_space<vmem>>, %arg1: memref<16x128xf32, #tpu.memory_space<vmem>>, %arg2: memref<32x128xf32, #tpu.memory_space<vmem>>, %arg3: memref<1x128xf32, #tpu.memory_space<vmem>>, %arg4: memref<32x128xf32, #tpu.memory_space<vmem>>, %arg5: memref<32x128xf32, #tpu.memory_space<vmem>>, %arg6: memref<1x128xf32, #tpu.memory_space<vmem>>, %arg7: memref<32x64xf32, #tpu.memory_space<vmem>>, %arg8: memref<1x64xf32, #tpu.memory_space<vmem>>, %arg9: memref<64x1xf32, #tpu.memory_space<vmem>>, %arg10: memref<1x1xf32, #tpu.memory_space<vmem>>, %arg11: memref<8x1xf32, #tpu.memory_space<vmem>>) attributes {dimension_semantics = [], scalar_prefetch = 0 : i64, scratch_operands = 0 : i64, tpu.core_type = #tpu.core_type<tc>} {
    %c0 = arith.constant 0 : index
    %c0_0 = arith.constant 0 : index
    %0 = vector.load %arg1[%c0, %c0_0] : memref<16x128xf32, #tpu.memory_space<vmem>>, vector<16x128xf32>
    %c0_1 = arith.constant 0 : index
    %c0_2 = arith.constant 0 : index
    %1 = vector.load %arg4[%c0_1, %c0_2] : memref<32x128xf32, #tpu.memory_space<vmem>>, vector<32x128xf32>
    %c0_3 = arith.constant 0 : index
    %c0_4 = arith.constant 0 : index
    %2 = vector.load %arg2[%c0_3, %c0_4] : memref<32x128xf32, #tpu.memory_space<vmem>>, vector<32x128xf32>
    %c0_5 = arith.constant 0 : index
    %c0_6 = arith.constant 0 : index
    %3 = vector.load %arg5[%c0_5, %c0_6] : memref<32x128xf32, #tpu.memory_space<vmem>>, vector<32x128xf32>
    %c0_7 = arith.constant 0 : index
    %c0_8 = arith.constant 0 : index
    %4 = vector.load %arg3[%c0_7, %c0_8] : memref<1x128xf32, #tpu.memory_space<vmem>>, vector<1x128xf32>
    %c0_9 = arith.constant 0 : index
    %c0_10 = arith.constant 0 : index
    %5 = vector.load %arg6[%c0_9, %c0_10] : memref<1x128xf32, #tpu.memory_space<vmem>>, vector<1x128xf32>
    %c0_11 = arith.constant 0 : index
    %c0_12 = arith.constant 0 : index
    %6 = vector.load %arg0[%c0_11, %c0_12] : memref<64x16xf32, #tpu.memory_space<vmem>>, vector<64x16xf32>
    %cst = arith.constant dense<0.000000e+00> : vector<64x128xf32>
    %7 = tpu.matmul %6, %0, %cst {dimension_numbers = #tpu.dot_dimension_numbers<[1], [0], [0], [1], [0, 0, 1, 1], [], []>} : vector<64x16xf32>, vector<16x128xf32>, vector<64x128xf32> -> vector<64x128xf32>
    %8 = vector.broadcast %4 : vector<1x128xf32> to vector<64x128xf32>
    %9 = arith.addf %7, %8 : vector<64x128xf32>
    %cst_13 = arith.constant 0.000000e+00 : f32
    %10 = vector.broadcast %cst_13 : f32 to vector<8x32xf32>
    %cst_14 = arith.constant 0.000000e+00 : f32
    %11 = vector.broadcast %cst_14 : f32 to vector<8x32xf32>
    %cst_15 = arith.constant 0.000000e+00 : f32
    %12 = vector.broadcast %cst_15 : f32 to vector<8x32xf32>
    %cst_16 = arith.constant 0.000000e+00 : f32
    %13 = vector.broadcast %cst_16 : f32 to vector<8x32xf32>
    %14 = vector.extract_strided_slice %9 {offsets = [0, 0], sizes = [8, 128], strides = [1, 1]} : vector<64x128xf32> to vector<8x128xf32>
    %cst_17 = arith.constant dense<0.000000e+00> : vector<8x128xf32>
    %15 = tpu.matmul %10, %2, %cst_17 {dimension_numbers = #tpu.dot_dimension_numbers<[1], [0], [0], [1], [0, 0, 1, 1], [], []>} : vector<8x32xf32>, vector<32x128xf32>, vector<8x128xf32> -> vector<8x128xf32>
    %16 = arith.addf %14, %15 : vector<8x128xf32>
    %17 = arith.negf %16 : vector<8x128xf32>
    %18 = math.exp %17 : vector<8x128xf32>
    %cst_18 = arith.constant 1.000000e+00 : f32
    %19 = vector.broadcast %cst_18 : f32 to vector<8x128xf32>
    %20 = arith.addf %19, %18 : vector<8x128xf32>
    %21 = arith.divf %19, %20 : vector<8x128xf32>
    %22 = vector.extract_strided_slice %21 {offsets = [0, 0], sizes = [8, 32], strides = [1, 1]} : vector<8x128xf32> to vector<8x32xf32>
    %23 = vector.extract_strided_slice %21 {offsets = [0, 32], sizes = [8, 32], strides = [1, 1]} : vector<8x128xf32> to vector<8x32xf32>
    %24 = vector.extract_strided_slice %21 {offsets = [0, 96], sizes = [8, 32], strides = [1, 1]} : vector<8x128xf32> to vector<8x32xf32>
    %25 = vector.extract_strided_slice %16 {offsets = [0, 64], sizes = [8, 32], strides = [1, 1]} : vector<8x128xf32> to vector<8x32xf32>
    %26 = math.tanh %25 : vector<8x32xf32>
    %27 = arith.mulf %23, %12 : vector<8x32xf32>
    %28 = arith.mulf %22, %26 : vector<8x32xf32>
    %29 = arith.addf %27, %28 : vector<8x32xf32>
    %30 = math.tanh %29 : vector<8x32xf32>
    %31 = arith.mulf %24, %30 : vector<8x32xf32>
    %cst_19 = arith.constant dense<0.000000e+00> : vector<8x128xf32>
    %32 = tpu.matmul %31, %1, %cst_19 {dimension_numbers = #tpu.dot_dimension_numbers<[1], [0], [0], [1], [0, 0, 1, 1], [], []>} : vector<8x32xf32>, vector<32x128xf32>, vector<8x128xf32> -> vector<8x128xf32>
    %33 = vector.broadcast %5 : vector<1x128xf32> to vector<8x128xf32>
    %34 = arith.addf %32, %33 : vector<8x128xf32>
    %cst_20 = arith.constant dense<0.000000e+00> : vector<8x128xf32>
    %35 = tpu.matmul %11, %3, %cst_20 {dimension_numbers = #tpu.dot_dimension_numbers<[1], [0], [0], [1], [0, 0, 1, 1], [], []>} : vector<8x32xf32>, vector<32x128xf32>, vector<8x128xf32> -> vector<8x128xf32>
    %36 = arith.addf %34, %35 : vector<8x128xf32>
    %37 = arith.negf %36 : vector<8x128xf32>
    %38 = math.exp %37 : vector<8x128xf32>
    %cst_21 = arith.constant 1.000000e+00 : f32
    %39 = vector.broadcast %cst_21 : f32 to vector<8x128xf32>
    %40 = arith.addf %39, %38 : vector<8x128xf32>
    %41 = arith.divf %39, %40 : vector<8x128xf32>
    %42 = vector.extract_strided_slice %41 {offsets = [0, 0], sizes = [8, 32], strides = [1, 1]} : vector<8x128xf32> to vector<8x32xf32>
    %43 = vector.extract_strided_slice %41 {offsets = [0, 32], sizes = [8, 32], strides = [1, 1]} : vector<8x128xf32> to vector<8x32xf32>
    %44 = vector.extract_strided_slice %41 {offsets = [0, 96], sizes = [8, 32], strides = [1, 1]} : vector<8x128xf32> to vector<8x32xf32>
    %45 = vector.extract_strided_slice %36 {offsets = [0, 64], sizes = [8, 32], strides = [1, 1]} : vector<8x128xf32> to vector<8x32xf32>
    %46 = math.tanh %45 : vector<8x32xf32>
    %47 = arith.mulf %43, %13 : vector<8x32xf32>
    %48 = arith.mulf %42, %46 : vector<8x32xf32>
    %49 = arith.addf %47, %48 : vector<8x32xf32>
    %50 = math.tanh %49 : vector<8x32xf32>
    %51 = arith.mulf %44, %50 : vector<8x32xf32>
    %52 = vector.extract_strided_slice %9 {offsets = [8, 0], sizes = [8, 128], strides = [1, 1]} : vector<64x128xf32> to vector<8x128xf32>
    %cst_22 = arith.constant dense<0.000000e+00> : vector<8x128xf32>
    %53 = tpu.matmul %31, %2, %cst_22 {dimension_numbers = #tpu.dot_dimension_numbers<[1], [0], [0], [1], [0, 0, 1, 1], [], []>} : vector<8x32xf32>, vector<32x128xf32>, vector<8x128xf32> -> vector<8x128xf32>
    %54 = arith.addf %52, %53 : vector<8x128xf32>
    %55 = arith.negf %54 : vector<8x128xf32>
    %56 = math.exp %55 : vector<8x128xf32>
    %cst_23 = arith.constant 1.000000e+00 : f32
    %57 = vector.broadcast %cst_23 : f32 to vector<8x128xf32>
    %58 = arith.addf %57, %56 : vector<8x128xf32>
    %59 = arith.divf %57, %58 : vector<8x128xf32>
    %60 = vector.extract_strided_slice %59 {offsets = [0, 0], sizes = [8, 32], strides = [1, 1]} : vector<8x128xf32> to vector<8x32xf32>
    %61 = vector.extract_strided_slice %59 {offsets = [0, 32], sizes = [8, 32], strides = [1, 1]} : vector<8x128xf32> to vector<8x32xf32>
    %62 = vector.extract_strided_slice %59 {offsets = [0, 96], sizes = [8, 32], strides = [1, 1]} : vector<8x128xf32> to vector<8x32xf32>
    %63 = vector.extract_strided_slice %54 {offsets = [0, 64], sizes = [8, 32], strides = [1, 1]} : vector<8x128xf32> to vector<8x32xf32>
    %64 = math.tanh %63 : vector<8x32xf32>
    %65 = arith.mulf %61, %29 : vector<8x32xf32>
    %66 = arith.mulf %60, %64 : vector<8x32xf32>
    %67 = arith.addf %65, %66 : vector<8x32xf32>
    %68 = math.tanh %67 : vector<8x32xf32>
    %69 = arith.mulf %62, %68 : vector<8x32xf32>
    %cst_24 = arith.constant dense<0.000000e+00> : vector<8x128xf32>
    %70 = tpu.matmul %69, %1, %cst_24 {dimension_numbers = #tpu.dot_dimension_numbers<[1], [0], [0], [1], [0, 0, 1, 1], [], []>} : vector<8x32xf32>, vector<32x128xf32>, vector<8x128xf32> -> vector<8x128xf32>
    %71 = vector.broadcast %5 : vector<1x128xf32> to vector<8x128xf32>
    %72 = arith.addf %70, %71 : vector<8x128xf32>
    %cst_25 = arith.constant dense<0.000000e+00> : vector<8x128xf32>
    %73 = tpu.matmul %51, %3, %cst_25 {dimension_numbers = #tpu.dot_dimension_numbers<[1], [0], [0], [1], [0, 0, 1, 1], [], []>} : vector<8x32xf32>, vector<32x128xf32>, vector<8x128xf32> -> vector<8x128xf32>
    %74 = arith.addf %72, %73 : vector<8x128xf32>
    %75 = arith.negf %74 : vector<8x128xf32>
    %76 = math.exp %75 : vector<8x128xf32>
    %cst_26 = arith.constant 1.000000e+00 : f32
    %77 = vector.broadcast %cst_26 : f32 to vector<8x128xf32>
    %78 = arith.addf %77, %76 : vector<8x128xf32>
    %79 = arith.divf %77, %78 : vector<8x128xf32>
    %80 = vector.extract_strided_slice %79 {offsets = [0, 0], sizes = [8, 32], strides = [1, 1]} : vector<8x128xf32> to vector<8x32xf32>
    %81 = vector.extract_strided_slice %79 {offsets = [0, 32], sizes = [8, 32], strides = [1, 1]} : vector<8x128xf32> to vector<8x32xf32>
    %82 = vector.extract_strided_slice %79 {offsets = [0, 96], sizes = [8, 32], strides = [1, 1]} : vector<8x128xf32> to vector<8x32xf32>
    %83 = vector.extract_strided_slice %74 {offsets = [0, 64], sizes = [8, 32], strides = [1, 1]} : vector<8x128xf32> to vector<8x32xf32>
    %84 = math.tanh %83 : vector<8x32xf32>
    %85 = arith.mulf %81, %49 : vector<8x32xf32>
    %86 = arith.mulf %80, %84 : vector<8x32xf32>
    %87 = arith.addf %85, %86 : vector<8x32xf32>
    %88 = math.tanh %87 : vector<8x32xf32>
    %89 = arith.mulf %82, %88 : vector<8x32xf32>
    %90 = vector.extract_strided_slice %9 {offsets = [16, 0], sizes = [8, 128], strides = [1, 1]} : vector<64x128xf32> to vector<8x128xf32>
    %cst_27 = arith.constant dense<0.000000e+00> : vector<8x128xf32>
    %91 = tpu.matmul %69, %2, %cst_27 {dimension_numbers = #tpu.dot_dimension_numbers<[1], [0], [0], [1], [0, 0, 1, 1], [], []>} : vector<8x32xf32>, vector<32x128xf32>, vector<8x128xf32> -> vector<8x128xf32>
    %92 = arith.addf %90, %91 : vector<8x128xf32>
    %93 = arith.negf %92 : vector<8x128xf32>
    %94 = math.exp %93 : vector<8x128xf32>
    %cst_28 = arith.constant 1.000000e+00 : f32
    %95 = vector.broadcast %cst_28 : f32 to vector<8x128xf32>
    %96 = arith.addf %95, %94 : vector<8x128xf32>
    %97 = arith.divf %95, %96 : vector<8x128xf32>
    %98 = vector.extract_strided_slice %97 {offsets = [0, 0], sizes = [8, 32], strides = [1, 1]} : vector<8x128xf32> to vector<8x32xf32>
    %99 = vector.extract_strided_slice %97 {offsets = [0, 32], sizes = [8, 32], strides = [1, 1]} : vector<8x128xf32> to vector<8x32xf32>
    %100 = vector.extract_strided_slice %97 {offsets = [0, 96], sizes = [8, 32], strides = [1, 1]} : vector<8x128xf32> to vector<8x32xf32>
    %101 = vector.extract_strided_slice %92 {offsets = [0, 64], sizes = [8, 32], strides = [1, 1]} : vector<8x128xf32> to vector<8x32xf32>
    %102 = math.tanh %101 : vector<8x32xf32>
    %103 = arith.mulf %99, %67 : vector<8x32xf32>
    %104 = arith.mulf %98, %102 : vector<8x32xf32>
    %105 = arith.addf %103, %104 : vector<8x32xf32>
    %106 = math.tanh %105 : vector<8x32xf32>
    %107 = arith.mulf %100, %106 : vector<8x32xf32>
    %cst_29 = arith.constant dense<0.000000e+00> : vector<8x128xf32>
    %108 = tpu.matmul %107, %1, %cst_29 {dimension_numbers = #tpu.dot_dimension_numbers<[1], [0], [0], [1], [0, 0, 1, 1], [], []>} : vector<8x32xf32>, vector<32x128xf32>, vector<8x128xf32> -> vector<8x128xf32>
    %109 = vector.broadcast %5 : vector<1x128xf32> to vector<8x128xf32>
    %110 = arith.addf %108, %109 : vector<8x128xf32>
    %cst_30 = arith.constant dense<0.000000e+00> : vector<8x128xf32>
    %111 = tpu.matmul %89, %3, %cst_30 {dimension_numbers = #tpu.dot_dimension_numbers<[1], [0], [0], [1], [0, 0, 1, 1], [], []>} : vector<8x32xf32>, vector<32x128xf32>, vector<8x128xf32> -> vector<8x128xf32>
    %112 = arith.addf %110, %111 : vector<8x128xf32>
    %113 = arith.negf %112 : vector<8x128xf32>
    %114 = math.exp %113 : vector<8x128xf32>
    %cst_31 = arith.constant 1.000000e+00 : f32
    %115 = vector.broadcast %cst_31 : f32 to vector<8x128xf32>
    %116 = arith.addf %115, %114 : vector<8x128xf32>
    %117 = arith.divf %115, %116 : vector<8x128xf32>
    %118 = vector.extract_strided_slice %117 {offsets = [0, 0], sizes = [8, 32], strides = [1, 1]} : vector<8x128xf32> to vector<8x32xf32>
    %119 = vector.extract_strided_slice %117 {offsets = [0, 32], sizes = [8, 32], strides = [1, 1]} : vector<8x128xf32> to vector<8x32xf32>
    %120 = vector.extract_strided_slice %117 {offsets = [0, 96], sizes = [8, 32], strides = [1, 1]} : vector<8x128xf32> to vector<8x32xf32>
    %121 = vector.extract_strided_slice %112 {offsets = [0, 64], sizes = [8, 32], strides = [1, 1]} : vector<8x128xf32> to vector<8x32xf32>
    %122 = math.tanh %121 : vector<8x32xf32>
    %123 = arith.mulf %119, %87 : vector<8x32xf32>
    %124 = arith.mulf %118, %122 : vector<8x32xf32>
    %125 = arith.addf %123, %124 : vector<8x32xf32>
    %126 = math.tanh %125 : vector<8x32xf32>
    %127 = arith.mulf %120, %126 : vector<8x32xf32>
    %128 = vector.extract_strided_slice %9 {offsets = [24, 0], sizes = [8, 128], strides = [1, 1]} : vector<64x128xf32> to vector<8x128xf32>
    %cst_32 = arith.constant dense<0.000000e+00> : vector<8x128xf32>
    %129 = tpu.matmul %107, %2, %cst_32 {dimension_numbers = #tpu.dot_dimension_numbers<[1], [0], [0], [1], [0, 0, 1, 1], [], []>} : vector<8x32xf32>, vector<32x128xf32>, vector<8x128xf32> -> vector<8x128xf32>
    %130 = arith.addf %128, %129 : vector<8x128xf32>
    %131 = arith.negf %130 : vector<8x128xf32>
    %132 = math.exp %131 : vector<8x128xf32>
    %cst_33 = arith.constant 1.000000e+00 : f32
    %133 = vector.broadcast %cst_33 : f32 to vector<8x128xf32>
    %134 = arith.addf %133, %132 : vector<8x128xf32>
    %135 = arith.divf %133, %134 : vector<8x128xf32>
    %136 = vector.extract_strided_slice %135 {offsets = [0, 0], sizes = [8, 32], strides = [1, 1]} : vector<8x128xf32> to vector<8x32xf32>
    %137 = vector.extract_strided_slice %135 {offsets = [0, 32], sizes = [8, 32], strides = [1, 1]} : vector<8x128xf32> to vector<8x32xf32>
    %138 = vector.extract_strided_slice %135 {offsets = [0, 96], sizes = [8, 32], strides = [1, 1]} : vector<8x128xf32> to vector<8x32xf32>
    %139 = vector.extract_strided_slice %130 {offsets = [0, 64], sizes = [8, 32], strides = [1, 1]} : vector<8x128xf32> to vector<8x32xf32>
    %140 = math.tanh %139 : vector<8x32xf32>
    %141 = arith.mulf %137, %105 : vector<8x32xf32>
    %142 = arith.mulf %136, %140 : vector<8x32xf32>
    %143 = arith.addf %141, %142 : vector<8x32xf32>
    %144 = math.tanh %143 : vector<8x32xf32>
    %145 = arith.mulf %138, %144 : vector<8x32xf32>
    %cst_34 = arith.constant dense<0.000000e+00> : vector<8x128xf32>
    %146 = tpu.matmul %145, %1, %cst_34 {dimension_numbers = #tpu.dot_dimension_numbers<[1], [0], [0], [1], [0, 0, 1, 1], [], []>} : vector<8x32xf32>, vector<32x128xf32>, vector<8x128xf32> -> vector<8x128xf32>
    %147 = vector.broadcast %5 : vector<1x128xf32> to vector<8x128xf32>
    %148 = arith.addf %146, %147 : vector<8x128xf32>
    %cst_35 = arith.constant dense<0.000000e+00> : vector<8x128xf32>
    %149 = tpu.matmul %127, %3, %cst_35 {dimension_numbers = #tpu.dot_dimension_numbers<[1], [0], [0], [1], [0, 0, 1, 1], [], []>} : vector<8x32xf32>, vector<32x128xf32>, vector<8x128xf32> -> vector<8x128xf32>
    %150 = arith.addf %148, %149 : vector<8x128xf32>
    %151 = arith.negf %150 : vector<8x128xf32>
    %152 = math.exp %151 : vector<8x128xf32>
    %cst_36 = arith.constant 1.000000e+00 : f32
    %153 = vector.broadcast %cst_36 : f32 to vector<8x128xf32>
    %154 = arith.addf %153, %152 : vector<8x128xf32>
    %155 = arith.divf %153, %154 : vector<8x128xf32>
    %156 = vector.extract_strided_slice %155 {offsets = [0, 0], sizes = [8, 32], strides = [1, 1]} : vector<8x128xf32> to vector<8x32xf32>
    %157 = vector.extract_strided_slice %155 {offsets = [0, 32], sizes = [8, 32], strides = [1, 1]} : vector<8x128xf32> to vector<8x32xf32>
    %158 = vector.extract_strided_slice %155 {offsets = [0, 96], sizes = [8, 32], strides = [1, 1]} : vector<8x128xf32> to vector<8x32xf32>
    %159 = vector.extract_strided_slice %150 {offsets = [0, 64], sizes = [8, 32], strides = [1, 1]} : vector<8x128xf32> to vector<8x32xf32>
    %160 = math.tanh %159 : vector<8x32xf32>
    %161 = arith.mulf %157, %125 : vector<8x32xf32>
    %162 = arith.mulf %156, %160 : vector<8x32xf32>
    %163 = arith.addf %161, %162 : vector<8x32xf32>
    %164 = math.tanh %163 : vector<8x32xf32>
    %165 = arith.mulf %158, %164 : vector<8x32xf32>
    %166 = vector.extract_strided_slice %9 {offsets = [32, 0], sizes = [8, 128], strides = [1, 1]} : vector<64x128xf32> to vector<8x128xf32>
    %cst_37 = arith.constant dense<0.000000e+00> : vector<8x128xf32>
    %167 = tpu.matmul %145, %2, %cst_37 {dimension_numbers = #tpu.dot_dimension_numbers<[1], [0], [0], [1], [0, 0, 1, 1], [], []>} : vector<8x32xf32>, vector<32x128xf32>, vector<8x128xf32> -> vector<8x128xf32>
    %168 = arith.addf %166, %167 : vector<8x128xf32>
    %169 = arith.negf %168 : vector<8x128xf32>
    %170 = math.exp %169 : vector<8x128xf32>
    %cst_38 = arith.constant 1.000000e+00 : f32
    %171 = vector.broadcast %cst_38 : f32 to vector<8x128xf32>
    %172 = arith.addf %171, %170 : vector<8x128xf32>
    %173 = arith.divf %171, %172 : vector<8x128xf32>
    %174 = vector.extract_strided_slice %173 {offsets = [0, 0], sizes = [8, 32], strides = [1, 1]} : vector<8x128xf32> to vector<8x32xf32>
    %175 = vector.extract_strided_slice %173 {offsets = [0, 32], sizes = [8, 32], strides = [1, 1]} : vector<8x128xf32> to vector<8x32xf32>
    %176 = vector.extract_strided_slice %173 {offsets = [0, 96], sizes = [8, 32], strides = [1, 1]} : vector<8x128xf32> to vector<8x32xf32>
    %177 = vector.extract_strided_slice %168 {offsets = [0, 64], sizes = [8, 32], strides = [1, 1]} : vector<8x128xf32> to vector<8x32xf32>
    %178 = math.tanh %177 : vector<8x32xf32>
    %179 = arith.mulf %175, %143 : vector<8x32xf32>
    %180 = arith.mulf %174, %178 : vector<8x32xf32>
    %181 = arith.addf %179, %180 : vector<8x32xf32>
    %182 = math.tanh %181 : vector<8x32xf32>
    %183 = arith.mulf %176, %182 : vector<8x32xf32>
    %cst_39 = arith.constant dense<0.000000e+00> : vector<8x128xf32>
    %184 = tpu.matmul %183, %1, %cst_39 {dimension_numbers = #tpu.dot_dimension_numbers<[1], [0], [0], [1], [0, 0, 1, 1], [], []>} : vector<8x32xf32>, vector<32x128xf32>, vector<8x128xf32> -> vector<8x128xf32>
    %185 = vector.broadcast %5 : vector<1x128xf32> to vector<8x128xf32>
    %186 = arith.addf %184, %185 : vector<8x128xf32>
    %cst_40 = arith.constant dense<0.000000e+00> : vector<8x128xf32>
    %187 = tpu.matmul %165, %3, %cst_40 {dimension_numbers = #tpu.dot_dimension_numbers<[1], [0], [0], [1], [0, 0, 1, 1], [], []>} : vector<8x32xf32>, vector<32x128xf32>, vector<8x128xf32> -> vector<8x128xf32>
    %188 = arith.addf %186, %187 : vector<8x128xf32>
    %189 = arith.negf %188 : vector<8x128xf32>
    %190 = math.exp %189 : vector<8x128xf32>
    %cst_41 = arith.constant 1.000000e+00 : f32
    %191 = vector.broadcast %cst_41 : f32 to vector<8x128xf32>
    %192 = arith.addf %191, %190 : vector<8x128xf32>
    %193 = arith.divf %191, %192 : vector<8x128xf32>
    %194 = vector.extract_strided_slice %193 {offsets = [0, 0], sizes = [8, 32], strides = [1, 1]} : vector<8x128xf32> to vector<8x32xf32>
    %195 = vector.extract_strided_slice %193 {offsets = [0, 32], sizes = [8, 32], strides = [1, 1]} : vector<8x128xf32> to vector<8x32xf32>
    %196 = vector.extract_strided_slice %193 {offsets = [0, 96], sizes = [8, 32], strides = [1, 1]} : vector<8x128xf32> to vector<8x32xf32>
    %197 = vector.extract_strided_slice %188 {offsets = [0, 64], sizes = [8, 32], strides = [1, 1]} : vector<8x128xf32> to vector<8x32xf32>
    %198 = math.tanh %197 : vector<8x32xf32>
    %199 = arith.mulf %195, %163 : vector<8x32xf32>
    %200 = arith.mulf %194, %198 : vector<8x32xf32>
    %201 = arith.addf %199, %200 : vector<8x32xf32>
    %202 = math.tanh %201 : vector<8x32xf32>
    %203 = arith.mulf %196, %202 : vector<8x32xf32>
    %204 = vector.extract_strided_slice %9 {offsets = [40, 0], sizes = [8, 128], strides = [1, 1]} : vector<64x128xf32> to vector<8x128xf32>
    %cst_42 = arith.constant dense<0.000000e+00> : vector<8x128xf32>
    %205 = tpu.matmul %183, %2, %cst_42 {dimension_numbers = #tpu.dot_dimension_numbers<[1], [0], [0], [1], [0, 0, 1, 1], [], []>} : vector<8x32xf32>, vector<32x128xf32>, vector<8x128xf32> -> vector<8x128xf32>
    %206 = arith.addf %204, %205 : vector<8x128xf32>
    %207 = arith.negf %206 : vector<8x128xf32>
    %208 = math.exp %207 : vector<8x128xf32>
    %cst_43 = arith.constant 1.000000e+00 : f32
    %209 = vector.broadcast %cst_43 : f32 to vector<8x128xf32>
    %210 = arith.addf %209, %208 : vector<8x128xf32>
    %211 = arith.divf %209, %210 : vector<8x128xf32>
    %212 = vector.extract_strided_slice %211 {offsets = [0, 0], sizes = [8, 32], strides = [1, 1]} : vector<8x128xf32> to vector<8x32xf32>
    %213 = vector.extract_strided_slice %211 {offsets = [0, 32], sizes = [8, 32], strides = [1, 1]} : vector<8x128xf32> to vector<8x32xf32>
    %214 = vector.extract_strided_slice %211 {offsets = [0, 96], sizes = [8, 32], strides = [1, 1]} : vector<8x128xf32> to vector<8x32xf32>
    %215 = vector.extract_strided_slice %206 {offsets = [0, 64], sizes = [8, 32], strides = [1, 1]} : vector<8x128xf32> to vector<8x32xf32>
    %216 = math.tanh %215 : vector<8x32xf32>
    %217 = arith.mulf %213, %181 : vector<8x32xf32>
    %218 = arith.mulf %212, %216 : vector<8x32xf32>
    %219 = arith.addf %217, %218 : vector<8x32xf32>
    %220 = math.tanh %219 : vector<8x32xf32>
    %221 = arith.mulf %214, %220 : vector<8x32xf32>
    %cst_44 = arith.constant dense<0.000000e+00> : vector<8x128xf32>
    %222 = tpu.matmul %221, %1, %cst_44 {dimension_numbers = #tpu.dot_dimension_numbers<[1], [0], [0], [1], [0, 0, 1, 1], [], []>} : vector<8x32xf32>, vector<32x128xf32>, vector<8x128xf32> -> vector<8x128xf32>
    %223 = vector.broadcast %5 : vector<1x128xf32> to vector<8x128xf32>
    %224 = arith.addf %222, %223 : vector<8x128xf32>
    %cst_45 = arith.constant dense<0.000000e+00> : vector<8x128xf32>
    %225 = tpu.matmul %203, %3, %cst_45 {dimension_numbers = #tpu.dot_dimension_numbers<[1], [0], [0], [1], [0, 0, 1, 1], [], []>} : vector<8x32xf32>, vector<32x128xf32>, vector<8x128xf32> -> vector<8x128xf32>
    %226 = arith.addf %224, %225 : vector<8x128xf32>
    %227 = arith.negf %226 : vector<8x128xf32>
    %228 = math.exp %227 : vector<8x128xf32>
    %cst_46 = arith.constant 1.000000e+00 : f32
    %229 = vector.broadcast %cst_46 : f32 to vector<8x128xf32>
    %230 = arith.addf %229, %228 : vector<8x128xf32>
    %231 = arith.divf %229, %230 : vector<8x128xf32>
    %232 = vector.extract_strided_slice %231 {offsets = [0, 0], sizes = [8, 32], strides = [1, 1]} : vector<8x128xf32> to vector<8x32xf32>
    %233 = vector.extract_strided_slice %231 {offsets = [0, 32], sizes = [8, 32], strides = [1, 1]} : vector<8x128xf32> to vector<8x32xf32>
    %234 = vector.extract_strided_slice %231 {offsets = [0, 96], sizes = [8, 32], strides = [1, 1]} : vector<8x128xf32> to vector<8x32xf32>
    %235 = vector.extract_strided_slice %226 {offsets = [0, 64], sizes = [8, 32], strides = [1, 1]} : vector<8x128xf32> to vector<8x32xf32>
    %236 = math.tanh %235 : vector<8x32xf32>
    %237 = arith.mulf %233, %201 : vector<8x32xf32>
    %238 = arith.mulf %232, %236 : vector<8x32xf32>
    %239 = arith.addf %237, %238 : vector<8x32xf32>
    %240 = math.tanh %239 : vector<8x32xf32>
    %241 = arith.mulf %234, %240 : vector<8x32xf32>
    %242 = vector.extract_strided_slice %9 {offsets = [48, 0], sizes = [8, 128], strides = [1, 1]} : vector<64x128xf32> to vector<8x128xf32>
    %cst_47 = arith.constant dense<0.000000e+00> : vector<8x128xf32>
    %243 = tpu.matmul %221, %2, %cst_47 {dimension_numbers = #tpu.dot_dimension_numbers<[1], [0], [0], [1], [0, 0, 1, 1], [], []>} : vector<8x32xf32>, vector<32x128xf32>, vector<8x128xf32> -> vector<8x128xf32>
    %244 = arith.addf %242, %243 : vector<8x128xf32>
    %245 = arith.negf %244 : vector<8x128xf32>
    %246 = math.exp %245 : vector<8x128xf32>
    %cst_48 = arith.constant 1.000000e+00 : f32
    %247 = vector.broadcast %cst_48 : f32 to vector<8x128xf32>
    %248 = arith.addf %247, %246 : vector<8x128xf32>
    %249 = arith.divf %247, %248 : vector<8x128xf32>
    %250 = vector.extract_strided_slice %249 {offsets = [0, 0], sizes = [8, 32], strides = [1, 1]} : vector<8x128xf32> to vector<8x32xf32>
    %251 = vector.extract_strided_slice %249 {offsets = [0, 32], sizes = [8, 32], strides = [1, 1]} : vector<8x128xf32> to vector<8x32xf32>
    %252 = vector.extract_strided_slice %249 {offsets = [0, 96], sizes = [8, 32], strides = [1, 1]} : vector<8x128xf32> to vector<8x32xf32>
    %253 = vector.extract_strided_slice %244 {offsets = [0, 64], sizes = [8, 32], strides = [1, 1]} : vector<8x128xf32> to vector<8x32xf32>
    %254 = math.tanh %253 : vector<8x32xf32>
    %255 = arith.mulf %251, %219 : vector<8x32xf32>
    %256 = arith.mulf %250, %254 : vector<8x32xf32>
    %257 = arith.addf %255, %256 : vector<8x32xf32>
    %258 = math.tanh %257 : vector<8x32xf32>
    %259 = arith.mulf %252, %258 : vector<8x32xf32>
    %cst_49 = arith.constant dense<0.000000e+00> : vector<8x128xf32>
    %260 = tpu.matmul %259, %1, %cst_49 {dimension_numbers = #tpu.dot_dimension_numbers<[1], [0], [0], [1], [0, 0, 1, 1], [], []>} : vector<8x32xf32>, vector<32x128xf32>, vector<8x128xf32> -> vector<8x128xf32>
    %261 = vector.broadcast %5 : vector<1x128xf32> to vector<8x128xf32>
    %262 = arith.addf %260, %261 : vector<8x128xf32>
    %cst_50 = arith.constant dense<0.000000e+00> : vector<8x128xf32>
    %263 = tpu.matmul %241, %3, %cst_50 {dimension_numbers = #tpu.dot_dimension_numbers<[1], [0], [0], [1], [0, 0, 1, 1], [], []>} : vector<8x32xf32>, vector<32x128xf32>, vector<8x128xf32> -> vector<8x128xf32>
    %264 = arith.addf %262, %263 : vector<8x128xf32>
    %265 = arith.negf %264 : vector<8x128xf32>
    %266 = math.exp %265 : vector<8x128xf32>
    %cst_51 = arith.constant 1.000000e+00 : f32
    %267 = vector.broadcast %cst_51 : f32 to vector<8x128xf32>
    %268 = arith.addf %267, %266 : vector<8x128xf32>
    %269 = arith.divf %267, %268 : vector<8x128xf32>
    %270 = vector.extract_strided_slice %269 {offsets = [0, 0], sizes = [8, 32], strides = [1, 1]} : vector<8x128xf32> to vector<8x32xf32>
    %271 = vector.extract_strided_slice %269 {offsets = [0, 32], sizes = [8, 32], strides = [1, 1]} : vector<8x128xf32> to vector<8x32xf32>
    %272 = vector.extract_strided_slice %269 {offsets = [0, 96], sizes = [8, 32], strides = [1, 1]} : vector<8x128xf32> to vector<8x32xf32>
    %273 = vector.extract_strided_slice %264 {offsets = [0, 64], sizes = [8, 32], strides = [1, 1]} : vector<8x128xf32> to vector<8x32xf32>
    %274 = math.tanh %273 : vector<8x32xf32>
    %275 = arith.mulf %271, %239 : vector<8x32xf32>
    %276 = arith.mulf %270, %274 : vector<8x32xf32>
    %277 = arith.addf %275, %276 : vector<8x32xf32>
    %278 = math.tanh %277 : vector<8x32xf32>
    %279 = arith.mulf %272, %278 : vector<8x32xf32>
    %280 = vector.extract_strided_slice %9 {offsets = [56, 0], sizes = [8, 128], strides = [1, 1]} : vector<64x128xf32> to vector<8x128xf32>
    %cst_52 = arith.constant dense<0.000000e+00> : vector<8x128xf32>
    %281 = tpu.matmul %259, %2, %cst_52 {dimension_numbers = #tpu.dot_dimension_numbers<[1], [0], [0], [1], [0, 0, 1, 1], [], []>} : vector<8x32xf32>, vector<32x128xf32>, vector<8x128xf32> -> vector<8x128xf32>
    %282 = arith.addf %280, %281 : vector<8x128xf32>
    %283 = arith.negf %282 : vector<8x128xf32>
    %284 = math.exp %283 : vector<8x128xf32>
    %cst_53 = arith.constant 1.000000e+00 : f32
    %285 = vector.broadcast %cst_53 : f32 to vector<8x128xf32>
    %286 = arith.addf %285, %284 : vector<8x128xf32>
    %287 = arith.divf %285, %286 : vector<8x128xf32>
    %288 = vector.extract_strided_slice %287 {offsets = [0, 0], sizes = [8, 32], strides = [1, 1]} : vector<8x128xf32> to vector<8x32xf32>
    %289 = vector.extract_strided_slice %287 {offsets = [0, 32], sizes = [8, 32], strides = [1, 1]} : vector<8x128xf32> to vector<8x32xf32>
    %290 = vector.extract_strided_slice %287 {offsets = [0, 96], sizes = [8, 32], strides = [1, 1]} : vector<8x128xf32> to vector<8x32xf32>
    %291 = vector.extract_strided_slice %282 {offsets = [0, 64], sizes = [8, 32], strides = [1, 1]} : vector<8x128xf32> to vector<8x32xf32>
    %292 = math.tanh %291 : vector<8x32xf32>
    %293 = arith.mulf %289, %257 : vector<8x32xf32>
    %294 = arith.mulf %288, %292 : vector<8x32xf32>
    %295 = arith.addf %293, %294 : vector<8x32xf32>
    %296 = math.tanh %295 : vector<8x32xf32>
    %297 = arith.mulf %290, %296 : vector<8x32xf32>
    %cst_54 = arith.constant dense<0.000000e+00> : vector<8x128xf32>
    %298 = tpu.matmul %297, %1, %cst_54 {dimension_numbers = #tpu.dot_dimension_numbers<[1], [0], [0], [1], [0, 0, 1, 1], [], []>} : vector<8x32xf32>, vector<32x128xf32>, vector<8x128xf32> -> vector<8x128xf32>
    %299 = vector.broadcast %5 : vector<1x128xf32> to vector<8x128xf32>
    %300 = arith.addf %298, %299 : vector<8x128xf32>
    %cst_55 = arith.constant dense<0.000000e+00> : vector<8x128xf32>
    %301 = tpu.matmul %279, %3, %cst_55 {dimension_numbers = #tpu.dot_dimension_numbers<[1], [0], [0], [1], [0, 0, 1, 1], [], []>} : vector<8x32xf32>, vector<32x128xf32>, vector<8x128xf32> -> vector<8x128xf32>
    %302 = arith.addf %300, %301 : vector<8x128xf32>
    %303 = arith.negf %302 : vector<8x128xf32>
    %304 = math.exp %303 : vector<8x128xf32>
    %cst_56 = arith.constant 1.000000e+00 : f32
    %305 = vector.broadcast %cst_56 : f32 to vector<8x128xf32>
    %306 = arith.addf %305, %304 : vector<8x128xf32>
    %307 = arith.divf %305, %306 : vector<8x128xf32>
    %308 = vector.extract_strided_slice %307 {offsets = [0, 0], sizes = [8, 32], strides = [1, 1]} : vector<8x128xf32> to vector<8x32xf32>
    %309 = vector.extract_strided_slice %307 {offsets = [0, 32], sizes = [8, 32], strides = [1, 1]} : vector<8x128xf32> to vector<8x32xf32>
    %310 = vector.extract_strided_slice %307 {offsets = [0, 96], sizes = [8, 32], strides = [1, 1]} : vector<8x128xf32> to vector<8x32xf32>
    %311 = vector.extract_strided_slice %302 {offsets = [0, 64], sizes = [8, 32], strides = [1, 1]} : vector<8x128xf32> to vector<8x32xf32>
    %312 = math.tanh %311 : vector<8x32xf32>
    %313 = arith.mulf %309, %277 : vector<8x32xf32>
    %314 = arith.mulf %308, %312 : vector<8x32xf32>
    %315 = arith.addf %313, %314 : vector<8x32xf32>
    %316 = math.tanh %315 : vector<8x32xf32>
    %317 = arith.mulf %310, %316 : vector<8x32xf32>
    %c0_57 = arith.constant 0 : index
    %c0_58 = arith.constant 0 : index
    %318 = vector.load %arg7[%c0_57, %c0_58] : memref<32x64xf32, #tpu.memory_space<vmem>>, vector<32x64xf32>
    %cst_59 = arith.constant dense<0.000000e+00> : vector<8x64xf32>
    %319 = tpu.matmul %317, %318, %cst_59 {dimension_numbers = #tpu.dot_dimension_numbers<[1], [0], [0], [1], [0, 0, 1, 1], [], []>} : vector<8x32xf32>, vector<32x64xf32>, vector<8x64xf32> -> vector<8x64xf32>
    %c0_60 = arith.constant 0 : index
    %c0_61 = arith.constant 0 : index
    %320 = vector.load %arg8[%c0_60, %c0_61] : memref<1x64xf32, #tpu.memory_space<vmem>>, vector<1x64xf32>
    %321 = vector.broadcast %320 : vector<1x64xf32> to vector<8x64xf32>
    %322 = arith.addf %319, %321 : vector<8x64xf32>
    %cst_62 = arith.constant 0.000000e+00 : f32
    %323 = vector.broadcast %cst_62 : f32 to vector<8x64xf32>
    %324 = arith.maximumf %322, %323 : vector<8x64xf32>
    %c0_63 = arith.constant 0 : index
    %c0_64 = arith.constant 0 : index
    %325 = vector.load %arg9[%c0_63, %c0_64] : memref<64x1xf32, #tpu.memory_space<vmem>>, vector<64x1xf32>
    %cst_65 = arith.constant dense<0.000000e+00> : vector<8x1xf32>
    %326 = tpu.matmul %324, %325, %cst_65 {dimension_numbers = #tpu.dot_dimension_numbers<[1], [0], [0], [1], [0, 0, 1, 1], [], []>} : vector<8x64xf32>, vector<64x1xf32>, vector<8x1xf32> -> vector<8x1xf32>
    %c0_66 = arith.constant 0 : index
    %c0_67 = arith.constant 0 : index
    %327 = vector.load %arg10[%c0_66, %c0_67] : memref<1x1xf32, #tpu.memory_space<vmem>>, vector<1x1xf32>
    %328 = vector.broadcast %327 : vector<1x1xf32> to vector<8x1xf32>
    %329 = arith.addf %326, %328 : vector<8x1xf32>
    %cst_68 = arith.constant 0.000000e+00 : f32
    %330 = vector.broadcast %cst_68 : f32 to vector<8x1xf32>
    %331 = arith.maximumf %329, %330 : vector<8x1xf32>
    %c0_69 = arith.constant 0 : index
    %c0_70 = arith.constant 0 : index
    %332 = vector.load %arg11[%c0_69, %c0_70] : memref<8x1xf32, #tpu.memory_space<vmem>>, vector<8x1xf32>
    tpu.vector_store %arg11[%c0_69, %c0_70], %331 {strides = array<i32>} : memref<8x1xf32, #tpu.memory_space<vmem>>, vector<8x1xf32>,
    return
  }
}

</mosaic_0001>

<llo_original>
// kernel: lstm_model_forward.1
$region0: #{lstm_model_forward.1}
  #allocation0 [shape = 'u32[]', space=smem, size = 0x4, offset = 0x4, fixed_abs, tag = 'smem constant byte address 0x4 - core index']
  #allocation1 [shape = 'u32[72,128]{1,0:T(1,128)}', space=vmem, size = 0x9000, scoped, tag = 'internal scratch']
  #allocation2 [shape = 'f32[1,1]{1,0:T(1,128)S(1)}', space=vmem, size = 0x200, scoped, tag = 'scoped memory for lstm_model_forward.1']
  %s0 = inlined_call_operand.vmem [shape: f32[64,16], index: 0, kind: input, shape index: {}]
  %s1 = inlined_call_operand.vmem [shape: f32[16,128], index: 1, kind: input, shape index: {}]
  %s2 = inlined_call_operand.vmem [shape: f32[32,128], index: 2, kind: input, shape index: {}]
  %s3 = inlined_call_operand.vmem [shape: f32[1,128], index: 3, kind: input, shape index: {}]
  %s4 = inlined_call_operand.vmem [shape: f32[32,128], index: 4, kind: input, shape index: {}]
  %s5 = inlined_call_operand.vmem [shape: f32[32,128], index: 5, kind: input, shape index: {}]
  %s6 = inlined_call_operand.vmem [shape: f32[1,128], index: 6, kind: input, shape index: {}]
  %s7 = inlined_call_operand.vmem [shape: f32[32,64], index: 7, kind: input, shape index: {}]
  %s8 = inlined_call_operand.vmem [shape: f32[1,64], index: 8, kind: input, shape index: {}]
  %s9 = inlined_call_operand.vmem [shape: f32[64,1], index: 9, kind: input, shape index: {}]
  %s10 = inlined_call_operand.<no memory space> [shape: f32[1,1], index: 10, kind: input, shape index: {}]
  %s11 = inlined_call_operand.vmem [shape: f32[8,1], index: 11, kind: output, shape index: {}]
  %s12 = sld [smem:[#allocation0]]
  $region54: #{lstm_model_forward.1} parent=0
    _
  %s14 = ssub.s32 1, %s12
  %s15 = scalar_select 0, %s14, %s12
  %v16 = vstv %s10
  %17 = vst [vmem:[#allocation2] sm:$0x1] %v16
  // Predicated region
  $region2: #{lstm_model_forward.1} parent=0 // pred_check
    _
  $region3: #{lstm_model_forward.1} parent=0 // pred_check_branch
    %19 = sbr.rel (0) target = $region5
  $region4: #{lstm_model_forward.1} parent=0 // pred_region
    _
  $region5: #{lstm_model_forward.1} parent=0 // pred_fallthru
    _
  // Predicated region
  $region6: #{lstm_model_forward.1} parent=0 // pred_check
    _
  $region7: #{lstm_model_forward.1} parent=0 // pred_check_branch
    %21 = sbr.rel (0) target = $region9
  $region8: #{lstm_model_forward.1} parent=0 // pred_region
    _
  $region9: #{lstm_model_forward.1} parent=0 // pred_fallthru
    _
  // Predicated region
  $region10: #{lstm_model_forward.1} parent=0 // pred_check
    _
  $region11: #{lstm_model_forward.1} parent=0 // pred_check_branch
    %23 = sbr.rel (0) target = $region13
  $region12: #{lstm_model_forward.1} parent=0 // pred_region
    _
  $region13: #{lstm_model_forward.1} parent=0 // pred_fallthru
    _
  // Predicated region
  $region14: #{lstm_model_forward.1} parent=0 // pred_check
    _
  $region15: #{lstm_model_forward.1} parent=0 // pred_check_branch
    %25 = sbr.rel (0) target = $region17
  $region16: #{lstm_model_forward.1} parent=0 // pred_region
    _
  $region17: #{lstm_model_forward.1} parent=0 // pred_fallthru
    _
  // Predicated region
  $region18: #{lstm_model_forward.1} parent=0 // pred_check
    _
  $region19: #{lstm_model_forward.1} parent=0 // pred_check_branch
    %27 = sbr.rel (0) target = $region21
  $region20: #{lstm_model_forward.1} parent=0 // pred_region
    _
  $region21: #{lstm_model_forward.1} parent=0 // pred_fallthru
    _
  // Predicated region
  $region22: #{lstm_model_forward.1} parent=0 // pred_check
    _
  $region23: #{lstm_model_forward.1} parent=0 // pred_check_branch
    %29 = sbr.rel (0) target = $region25
  $region24: #{lstm_model_forward.1} parent=0 // pred_region
    _
  $region25: #{lstm_model_forward.1} parent=0 // pred_fallthru
    _
  // Predicated region
  $region26: #{lstm_model_forward.1} parent=0 // pred_check
    _
  $region27: #{lstm_model_forward.1} parent=0 // pred_check_branch
    %31 = sbr.rel (0) target = $region29
  $region28: #{lstm_model_forward.1} parent=0 // pred_region
    _
  $region29: #{lstm_model_forward.1} parent=0 // pred_fallthru
    _
  // Predicated region
  $region30: #{lstm_model_forward.1} parent=0 // pred_check
    _
  $region31: #{lstm_model_forward.1} parent=0 // pred_check_branch
    %33 = sbr.rel (0) target = $region33
  $region32: #{lstm_model_forward.1} parent=0 // pred_region
    _
  $region33: #{lstm_model_forward.1} parent=0 // pred_fallthru
    _
  // Predicated region
  $region34: #{lstm_model_forward.1} parent=0 // pred_check
    _
  $region35: #{lstm_model_forward.1} parent=0 // pred_check_branch
    %35 = sbr.rel (0) target = $region37
  $region36: #{lstm_model_forward.1} parent=0 // pred_region
    _
  $region37: #{lstm_model_forward.1} parent=0 // pred_fallthru
    _
  // Predicated region
  $region38: #{lstm_model_forward.1} parent=0 // pred_check
    _
  $region39: #{lstm_model_forward.1} parent=0 // pred_check_branch
    %37 = sbr.rel (0) target = $region41
  $region40: #{lstm_model_forward.1} parent=0 // pred_region
    _
  $region41: #{lstm_model_forward.1} parent=0 // pred_fallthru
    _
  // Predicated region
  $region42: #{lstm_model_forward.1} parent=0 // pred_check
    _
  $region43: #{lstm_model_forward.1} parent=0 // pred_check_branch
    %39 = sbr.rel (0) target = $region45
  $region44: #{lstm_model_forward.1} parent=0 // pred_region
    _
  $region45: #{lstm_model_forward.1} parent=0 // pred_fallthru
    _
  %v40 = vld [vmem:[%s1] sm:$0xff]
  %v41 = vld [vmem:[%s1 + $0x8] sm:$0xff]
  %v42 = vld [vmem:[%s4] sm:$0xff]
  %v43 = vld [vmem:[%s4 + $0x8] sm:$0xff]
  %v44 = vld [vmem:[%s4 + $0x10] sm:$0xff]
  %v45 = vld [vmem:[%s4 + $0x18] sm:$0xff]
  %v46 = vld [vmem:[%s2] sm:$0xff]
  %v47 = vld [vmem:[%s2 + $0x8] sm:$0xff]
  %v48 = vld [vmem:[%s2 + $0x10] sm:$0xff]
  %v49 = vld [vmem:[%s2 + $0x18] sm:$0xff]
  %v50 = vld [vmem:[%s5] sm:$0xff]
  %v51 = vld [vmem:[%s5 + $0x8] sm:$0xff]
  %v52 = vld [vmem:[%s5 + $0x10] sm:$0xff]
  %v53 = vld [vmem:[%s5 + $0x18] sm:$0xff]
  %v54 = vld [vmem:[%s3] sm:$0x1]
  %v55 = vld [vmem:[%s6] sm:$0x1]
  %v56 = vld [vmem:[%s0] sm:$0xff]
  %v57 = vld [vmem:[%s0 + $0x8] sm:$0xff]
  %v58 = vld [vmem:[%s0 + $0x10] sm:$0xff]
  %v59 = vld [vmem:[%s0 + $0x18] sm:$0xff]
  %v60 = vld [vmem:[%s0 + $0x20] sm:$0xff]
  %v61 = vld [vmem:[%s0 + $0x28] sm:$0xff]
  %v62 = vld [vmem:[%s0 + $0x30] sm:$0xff]
  %v63 = vld [vmem:[%s0 + $0x38] sm:$0xff]
  %v65 = vperm.slane %v54, 0
  %vm67 = vcmask 130048
  %v69 = vsel %vm67, %v56, 0
  %v72 = vsel %vm67, %v57, 0
  %v75 = vsel %vm67, %v58, 0
  %v78 = vsel %vm67, %v59, 0
  %v81 = vsel %vm67, %v60, 0
  %v84 = vsel %vm67, %v61, 0
  %v87 = vsel %vm67, %v62, 0
  %v90 = vsel %vm67, %v63, 0
  %92 = vmatpush.msra.mxu0 0.0
  %93 = vmatpush.msra.mxu0 0.0
  %94 = vmatpush.msra.mxu0 0.0
  %95 = vmatpush.msra.mxu0 0.0
  %96 = vmatpush.msra.mxu0 0.0
  %97 = vmatpush.msra.mxu0 0.0
  %98 = vmatpush.msra.mxu0 0.0
  %99 = vmatpush.msra.mxu0 0.0
  %100 = vmatpush.msra.mxu0 0.0
  %101 = vmatpush.msra.mxu0 0.0
  %102 = vmatpush.msra.mxu0 0.0
  %103 = vmatpush.msra.mxu0 0.0
  %104 = vmatpush.msra.mxu0 0.0
  %105 = vmatpush.msra.mxu0 0.0
  %106 = vmatpush.msra.mxu0 %v41
  %107 = vmatpush.msra.mxu0 %v40
  %108 = vmatmul.f32.gmra.mxu0 %v69
  %v109 = vpop.f32.mrf.mxu0
  %v110 = vadd.f32 %v65, %v109
  %111 = vmatmul.f32.gmra.mxu0 %v72
  %v112 = vpop.f32.mrf.mxu0
  %v113 = vadd.f32 %v65, %v112
  %114 = vmatmul.f32.gmra.mxu0 %v75
  %v115 = vpop.f32.mrf.mxu0
  %v116 = vadd.f32 %v65, %v115
  %117 = vmatmul.f32.gmra.mxu0 %v78
  %v118 = vpop.f32.mrf.mxu0
  %v119 = vadd.f32 %v65, %v118
  %120 = vmatmul.f32.gmra.mxu0 %v81
  %v121 = vpop.f32.mrf.mxu0
  %v122 = vadd.f32 %v65, %v121
  %123 = vmatmul.f32.gmra.mxu0 %v84
  %v124 = vpop.f32.mrf.mxu0
  %v125 = vadd.f32 %v65, %v124
  %126 = vmatmul.f32.gmra.mxu0 %v87
  %v127 = vpop.f32.mrf.mxu0
  %v128 = vadd.f32 %v65, %v127
  %129 = vmatmul.f32.gmra.mxu0 %v90
  %v130 = vpop.f32.mrf.mxu0
  %v131 = vadd.f32 %v65, %v130
  %132 = vdwg.mxu0
  %vm133 = vcmask 261120
  %v135 = vsel %vm133, 0.0, 0
  %137 = vmatpush.msra.mxu0 0.0
  %138 = vmatpush.msra.mxu0 0.0
  %139 = vmatpush.msra.mxu0 0.0
  %140 = vmatpush.msra.mxu0 0.0
  %141 = vmatpush.msra.mxu0 0.0
  %142 = vmatpush.msra.mxu0 0.0
  %143 = vmatpush.msra.mxu0 0.0
  %144 = vmatpush.msra.mxu0 0.0
  %145 = vmatpush.msra.mxu0 0.0
  %146 = vmatpush.msra.mxu0 0.0
  %147 = vmatpush.msra.mxu0 0.0
  %148 = vmatpush.msra.mxu0 0.0
  %149 = vmatpush.msra.mxu0 %v49
  %150 = vmatpush.msra.mxu0 %v48
  %151 = vmatpush.msra.mxu0 %v47
  %152 = vmatpush.msra.mxu0 %v46
  %153 = vmatmul.f32.gmra.mxu0 %v135
  %v154 = vpop.f32.mrf.mxu0
  %v155 = vadd.f32 0.0, %v154
  %156 = vdwg.mxu0
  %v157 = vadd.f32 %v110, %v155
  %v158 = vxor.u32 %v157, 2147483648
  %v159 = vmul.f32 %v158, 1.442695
  %v160 = vpow.pop %v159
  %v161 = vadd.f32 %v160, 1.0
  %v162 = vrcp.pop %v161
  %v163 = vmul.f32 %v161, %v162
  %v164 = vsub.f32 1.0, %v163
  %v165 = vmul.f32 %v162, %v164
  %v166 = vadd.f32 %v162, %v165
  %vm167 = vweird.f32 %v161
  %vm168 = vweird.f32 %v162
  %vm169 = vmor %vm167, %vm168
  %v170 = vsel %vm169, %v162, %v166
  %v171 = vand.u32 2147483647, %v161
  %vm172 = vcmp.eq.f32.partialorder %v171, 8.507059e+37
  %v173 = vand.u32 %v161, 2147483648
  %v174 = vor.u32 1.1754944e-38, %v173
  %v175 = vsel %vm172, %v174, %v170
  %v176 = vmul.f32 1.0, %v175
  %v177 = vtanh.pop %v157
  %v178 = vmul.f32 %v176, 0.0
  %180 = vrot.lane.b32.xlu0 %v177, 64
  %v181 = vpop.permute.xlu0 %180
  %v183 = vmul.f32 %v176, %v181
  %185 = vrot.lane.b32.xlu0 %v183, 32
  %v186 = vpop.permute.xlu0 %185
  %v188 = vadd.f32 %v178, %v186
  %v189 = vtanh.pop %v188
  %191 = vrot.lane.b32.xlu0 %v189, 64
  %v192 = vpop.permute.xlu0 %191
  %v194 = vmul.f32 %v176, %v192
  %v196 = vperm.slane %v55, 0
  %199 = vrot.lane.b32.xlu0 %v194, 32
  %v200 = vpop.permute.xlu0 %199
  %v201 = vsel %vm133, %v200, 0
  %203 = vmatpush.msra.mxu0 0.0
  %204 = vmatpush.msra.mxu0 0.0
  %205 = vmatpush.msra.mxu0 0.0
  %206 = vmatpush.msra.mxu0 0.0
  %207 = vmatpush.msra.mxu0 0.0
  %208 = vmatpush.msra.mxu0 0.0
  %209 = vmatpush.msra.mxu0 0.0
  %210 = vmatpush.msra.mxu0 0.0
  %211 = vmatpush.msra.mxu0 0.0
  %212 = vmatpush.msra.mxu0 0.0
  %213 = vmatpush.msra.mxu0 0.0
  %214 = vmatpush.msra.mxu0 0.0
  %215 = vmatpush.msra.mxu0 %v45
  %216 = vmatpush.msra.mxu0 %v44
  %217 = vmatpush.msra.mxu0 %v43
  %218 = vmatpush.msra.mxu0 %v42
  %219 = vmatmul.f32.gmra.mxu0 %v201
  %v220 = vpop.f32.mrf.mxu0
  %v221 = vadd.f32 %v196, %v220
  %222 = vdwg.mxu0
  %223 = vmatpush.msra.mxu0 0.0
  %224 = vmatpush.msra.mxu0 0.0
  %225 = vmatpush.msra.mxu0 0.0
  %226 = vmatpush.msra.mxu0 0.0
  %227 = vmatpush.msra.mxu0 0.0
  %228 = vmatpush.msra.mxu0 0.0
  %229 = vmatpush.msra.mxu0 0.0
  %230 = vmatpush.msra.mxu0 0.0
  %231 = vmatpush.msra.mxu0 0.0
  %232 = vmatpush.msra.mxu0 0.0
  %233 = vmatpush.msra.mxu0 0.0
  %234 = vmatpush.msra.mxu0 0.0
  %235 = vmatpush.msra.mxu0 %v53
  %236 = vmatpush.msra.mxu0 %v52
  %237 = vmatpush.msra.mxu0 %v51
  %238 = vmatpush.msra.mxu0 %v50
  %239 = vmatmul.f32.gmra.mxu0 %v135
  %v240 = vpop.f32.mrf.mxu0
  %v241 = vadd.f32 0.0, %v240
  %242 = vdwg.mxu0
  %v243 = vadd.f32 %v221, %v241
  %v244 = vxor.u32 %v243, 2147483648
  %v245 = vmul.f32 %v244, 1.442695
  %v246 = vpow.pop %v245
  %v247 = vadd.f32 %v246, 1.0
  %v248 = vrcp.pop %v247
  %v249 = vmul.f32 %v247, %v248
  %v250 = vsub.f32 1.0, %v249
  %v251 = vmul.f32 %v248, %v250
  %v252 = vadd.f32 %v248, %v251
  %vm253 = vweird.f32 %v247
  %vm254 = vweird.f32 %v248
  %vm255 = vmor %vm253, %vm254
  %v256 = vsel %vm255, %v248, %v252
  %v257 = vand.u32 2147483647, %v247
  %vm258 = vcmp.eq.f32.partialorder %v257, 8.507059e+37
  %v259 = vand.u32 %v247, 2147483648
  %v260 = vor.u32 1.1754944e-38, %v259
  %v261 = vsel %vm258, %v260, %v256
  %v262 = vmul.f32 1.0, %v261
  %v263 = vtanh.pop %v243
  %v264 = vmul.f32 %v262, 0.0
  %266 = vrot.lane.b32.xlu0 %v263, 64
  %v267 = vpop.permute.xlu0 %266
  %v269 = vmul.f32 %v262, %v267
  %271 = vrot.lane.b32.xlu0 %v269, 32
  %v272 = vpop.permute.xlu0 %271
  %v274 = vadd.f32 %v264, %v272
  %v275 = vtanh.pop %v274
  %277 = vrot.lane.b32.xlu0 %v275, 64
  %v278 = vpop.permute.xlu0 %277
  %v280 = vmul.f32 %v262, %v278
  %281 = vmatpush.msra.mxu0 0.0
  %282 = vmatpush.msra.mxu0 0.0
  %283 = vmatpush.msra.mxu0 0.0
  %284 = vmatpush.msra.mxu0 0.0
  %285 = vmatpush.msra.mxu0 0.0
  %286 = vmatpush.msra.mxu0 0.0
  %287 = vmatpush.msra.mxu0 0.0
  %288 = vmatpush.msra.mxu0 0.0
  %289 = vmatpush.msra.mxu0 0.0
  %290 = vmatpush.msra.mxu0 0.0
  %291 = vmatpush.msra.mxu0 0.0
  %292 = vmatpush.msra.mxu0 0.0
  %293 = vmatpush.msra.mxu0 %v49
  %294 = vmatpush.msra.mxu0 %v48
  %295 = vmatpush.msra.mxu0 %v47
  %296 = vmatpush.msra.mxu0 %v46
  %297 = vmatmul.f32.gmra.mxu0 %v201
  %v298 = vpop.f32.mrf.mxu0
  %v299 = vadd.f32 0.0, %v298
  %300 = vdwg.mxu0
  %v301 = vadd.f32 %v113, %v299
  %v302 = vxor.u32 %v301, 2147483648
  %v303 = vmul.f32 %v302, 1.442695
  %v304 = vpow.pop %v303
  %v305 = vadd.f32 %v304, 1.0
  %v306 = vrcp.pop %v305
  %v307 = vmul.f32 %v305, %v306
  %v308 = vsub.f32 1.0, %v307
  %v309 = vmul.f32 %v306, %v308
  %v310 = vadd.f32 %v306, %v309
  %vm311 = vweird.f32 %v305
  %vm312 = vweird.f32 %v306
  %vm313 = vmor %vm311, %vm312
  %v314 = vsel %vm313, %v306, %v310
  %v315 = vand.u32 2147483647, %v305
  %vm316 = vcmp.eq.f32.partialorder %v315, 8.507059e+37
  %v317 = vand.u32 %v305, 2147483648
  %v318 = vor.u32 1.1754944e-38, %v317
  %v319 = vsel %vm316, %v318, %v314
  %v320 = vmul.f32 1.0, %v319
  %v321 = vtanh.pop %v301
  %v322 = vmul.f32 %v320, %v188
  %324 = vrot.lane.b32.xlu0 %v321, 64
  %v325 = vpop.permute.xlu0 %324
  %v327 = vmul.f32 %v320, %v325
  %329 = vrot.lane.b32.xlu0 %v327, 32
  %v330 = vpop.permute.xlu0 %329
  %v332 = vadd.f32 %v322, %v330
  %v333 = vtanh.pop %v332
  %335 = vrot.lane.b32.xlu0 %v333, 64
  %v336 = vpop.permute.xlu0 %335
  %v338 = vmul.f32 %v320, %v336
  %340 = vrot.lane.b32.xlu0 %v338, 32
  %v341 = vpop.permute.xlu0 %340
  %v342 = vsel %vm133, %v341, 0
  %344 = vmatpush.msra.mxu0 0.0
  %345 = vmatpush.msra.mxu0 0.0
  %346 = vmatpush.msra.mxu0 0.0
  %347 = vmatpush.msra.mxu0 0.0
  %348 = vmatpush.msra.mxu0 0.0
  %349 = vmatpush.msra.mxu0 0.0
  %350 = vmatpush.msra.mxu0 0.0
  %351 = vmatpush.msra.mxu0 0.0
  %352 = vmatpush.msra.mxu0 0.0
  %353 = vmatpush.msra.mxu0 0.0
  %354 = vmatpush.msra.mxu0 0.0
  %355 = vmatpush.msra.mxu0 0.0
  %356 = vmatpush.msra.mxu0 %v45
  %357 = vmatpush.msra.mxu0 %v44
  %358 = vmatpush.msra.mxu0 %v43
  %359 = vmatpush.msra.mxu0 %v42
  %360 = vmatmul.f32.gmra.mxu0 %v342
  %v361 = vpop.f32.mrf.mxu0
  %v362 = vadd.f32 %v196, %v361
  %363 = vdwg.mxu0
  %365 = vrot.lane.b32.xlu0 %v280, 32
  %v366 = vpop.permute.xlu0 %365
  %v367 = vsel %vm133, %v366, 0
  %369 = vmatpush.msra.mxu0 0.0
  %370 = vmatpush.msra.mxu0 0.0
  %371 = vmatpush.msra.mxu0 0.0
  %372 = vmatpush.msra.mxu0 0.0
  %373 = vmatpush.msra.mxu0 0.0
  %374 = vmatpush.msra.mxu0 0.0
  %375 = vmatpush.msra.mxu0 0.0
  %376 = vmatpush.msra.mxu0 0.0
  %377 = vmatpush.msra.mxu0 0.0
  %378 = vmatpush.msra.mxu0 0.0
  %379 = vmatpush.msra.mxu0 0.0
  %380 = vmatpush.msra.mxu0 0.0
  %381 = vmatpush.msra.mxu0 %v53
  %382 = vmatpush.msra.mxu0 %v52
  %383 = vmatpush.msra.mxu0 %v51
  %384 = vmatpush.msra.mxu0 %v50
  %385 = vmatmul.f32.gmra.mxu0 %v367
  %v386 = vpop.f32.mrf.mxu0
  %v387 = vadd.f32 0.0, %v386
  %388 = vdwg.mxu0
  %v389 = vadd.f32 %v362, %v387
  %v390 = vxor.u32 %v389, 2147483648
  %v391 = vmul.f32 %v390, 1.442695
  %v392 = vpow.pop %v391
  %v393 = vadd.f32 %v392, 1.0
  %v394 = vrcp.pop %v393
  %v395 = vmul.f32 %v393, %v394
  %v396 = vsub.f32 1.0, %v395
  %v397 = vmul.f32 %v394, %v396
  %v398 = vadd.f32 %v394, %v397
  %vm399 = vweird.f32 %v393
  %vm400 = vweird.f32 %v394
  %vm401 = vmor %vm399, %vm400
  %v402 = vsel %vm401, %v394, %v398
  %v403 = vand.u32 2147483647, %v393
  %vm404 = vcmp.eq.f32.partialorder %v403, 8.507059e+37
  %v405 = vand.u32 %v393, 2147483648
  %v406 = vor.u32 1.1754944e-38, %v405
  %v407 = vsel %vm404, %v406, %v402
  %v408 = vmul.f32 1.0, %v407
  %v409 = vtanh.pop %v389
  %v410 = vmul.f32 %v408, %v274
  %412 = vrot.lane.b32.xlu0 %v409, 64
  %v413 = vpop.permute.xlu0 %412
  %v415 = vmul.f32 %v408, %v413
  %417 = vrot.lane.b32.xlu0 %v415, 32
  %v418 = vpop.permute.xlu0 %417
  %v420 = vadd.f32 %v410, %v418
  %v421 = vtanh.pop %v420
  %423 = vrot.lane.b32.xlu0 %v421, 64
  %v424 = vpop.permute.xlu0 %423
  %v426 = vmul.f32 %v408, %v424
  %427 = vmatpush.msra.mxu0 0.0
  %428 = vmatpush.msra.mxu0 0.0
  %429 = vmatpush.msra.mxu0 0.0
  %430 = vmatpush.msra.mxu0 0.0
  %431 = vmatpush.msra.mxu0 0.0
  %432 = vmatpush.msra.mxu0 0.0
  %433 = vmatpush.msra.mxu0 0.0
  %434 = vmatpush.msra.mxu0 0.0
  %435 = vmatpush.msra.mxu0 0.0
  %436 = vmatpush.msra.mxu0 0.0
  %437 = vmatpush.msra.mxu0 0.0
  %438 = vmatpush.msra.mxu0 0.0
  %439 = vmatpush.msra.mxu0 %v49
  %440 = vmatpush.msra.mxu0 %v48
  %441 = vmatpush.msra.mxu0 %v47
  %442 = vmatpush.msra.mxu0 %v46
  %443 = vmatmul.f32.gmra.mxu0 %v342
  %v444 = vpop.f32.mrf.mxu0
  %v445 = vadd.f32 0.0, %v444
  %446 = vdwg.mxu0
  %v447 = vadd.f32 %v116, %v445
  %v448 = vxor.u32 %v447, 2147483648
  %v449 = vmul.f32 %v448, 1.442695
  %v450 = vpow.pop %v449
  %v451 = vadd.f32 %v450, 1.0
  %v452 = vrcp.pop %v451
  %v453 = vmul.f32 %v451, %v452
  %v454 = vsub.f32 1.0, %v453
  %v455 = vmul.f32 %v452, %v454
  %v456 = vadd.f32 %v452, %v455
  %vm457 = vweird.f32 %v451
  %vm458 = vweird.f32 %v452
  %vm459 = vmor %vm457, %vm458
  %v460 = vsel %vm459, %v452, %v456
  %v461 = vand.u32 2147483647, %v451
  %vm462 = vcmp.eq.f32.partialorder %v461, 8.507059e+37
  %v463 = vand.u32 %v451, 2147483648
  %v464 = vor.u32 1.1754944e-38, %v463
  %v465 = vsel %vm462, %v464, %v460
  %v466 = vmul.f32 1.0, %v465
  %v467 = vtanh.pop %v447
  %v468 = vmul.f32 %v466, %v332
  %470 = vrot.lane.b32.xlu0 %v467, 64
  %v471 = vpop.permute.xlu0 %470
  %v473 = vmul.f32 %v466, %v471
  %475 = vrot.lane.b32.xlu0 %v473, 32
  %v476 = vpop.permute.xlu0 %475
  %v478 = vadd.f32 %v468, %v476
  %v479 = vtanh.pop %v478
  %481 = vrot.lane.b32.xlu0 %v479, 64
  %v482 = vpop.permute.xlu0 %481
  %v484 = vmul.f32 %v466, %v482
  %486 = vrot.lane.b32.xlu0 %v484, 32
  %v487 = vpop.permute.xlu0 %486
  %v488 = vsel %vm133, %v487, 0
  %490 = vmatpush.msra.mxu0 0.0
  %491 = vmatpush.msra.mxu0 0.0
  %492 = vmatpush.msra.mxu0 0.0
  %493 = vmatpush.msra.mxu0 0.0
  %494 = vmatpush.msra.mxu0 0.0
  %495 = vmatpush.msra.mxu0 0.0
  %496 = vmatpush.msra.mxu0 0.0
  %497 = vmatpush.msra.mxu0 0.0
  %498 = vmatpush.msra.mxu0 0.0
  %499 = vmatpush.msra.mxu0 0.0
  %500 = vmatpush.msra.mxu0 0.0
  %501 = vmatpush.msra.mxu0 0.0
  %502 = vmatpush.msra.mxu0 %v45
  %503 = vmatpush.msra.mxu0 %v44
  %504 = vmatpush.msra.mxu0 %v43
  %505 = vmatpush.msra.mxu0 %v42
  %506 = vmatmul.f32.gmra.mxu0 %v488
  %v507 = vpop.f32.mrf.mxu0
  %v508 = vadd.f32 %v196, %v507
  %509 = vdwg.mxu0
  %511 = vrot.lane.b32.xlu0 %v426, 32
  %v512 = vpop.permute.xlu0 %511
  %v513 = vsel %vm133, %v512, 0
  %515 = vmatpush.msra.mxu0 0.0
  %516 = vmatpush.msra.mxu0 0.0
  %517 = vmatpush.msra.mxu0 0.0
  %518 = vmatpush.msra.mxu0 0.0
  %519 = vmatpush.msra.mxu0 0.0
  %520 = vmatpush.msra.mxu0 0.0
  %521 = vmatpush.msra.mxu0 0.0
  %522 = vmatpush.msra.mxu0 0.0
  %523 = vmatpush.msra.mxu0 0.0
  %524 = vmatpush.msra.mxu0 0.0
  %525 = vmatpush.msra.mxu0 0.0
  %526 = vmatpush.msra.mxu0 0.0
  %527 = vmatpush.msra.mxu0 %v53
  %528 = vmatpush.msra.mxu0 %v52
  %529 = vmatpush.msra.mxu0 %v51
  %530 = vmatpush.msra.mxu0 %v50
  %531 = vmatmul.f32.gmra.mxu0 %v513
  %v532 = vpop.f32.mrf.mxu0
  %v533 = vadd.f32 0.0, %v532
  %534 = vdwg.mxu0
  %v535 = vadd.f32 %v508, %v533
  %v536 = vxor.u32 %v535, 2147483648
  %v537 = vmul.f32 %v536, 1.442695
  %v538 = vpow.pop %v537
  %v539 = vadd.f32 %v538, 1.0
  %v540 = vrcp.pop %v539
  %v541 = vmul.f32 %v539, %v540
  %v542 = vsub.f32 1.0, %v541
  %v543 = vmul.f32 %v540, %v542
  %v544 = vadd.f32 %v540, %v543
  %vm545 = vweird.f32 %v539
  %vm546 = vweird.f32 %v540
  %vm547 = vmor %vm545, %vm546
  %v548 = vsel %vm547, %v540, %v544
  %v549 = vand.u32 2147483647, %v539
  %vm550 = vcmp.eq.f32.partialorder %v549, 8.507059e+37
  %v551 = vand.u32 %v539, 2147483648
  %v552 = vor.u32 1.1754944e-38, %v551
  %v553 = vsel %vm550, %v552, %v548
  %v554 = vmul.f32 1.0, %v553
  %v555 = vtanh.pop %v535
  %v556 = vmul.f32 %v554, %v420
  %558 = vrot.lane.b32.xlu0 %v555, 64
  %v559 = vpop.permute.xlu0 %558
  %v561 = vmul.f32 %v554, %v559
  %563 = vrot.lane.b32.xlu0 %v561, 32
  %v564 = vpop.permute.xlu0 %563
  %v566 = vadd.f32 %v556, %v564
  %v567 = vtanh.pop %v566
  %569 = vrot.lane.b32.xlu0 %v567, 64
  %v570 = vpop.permute.xlu0 %569
  %v572 = vmul.f32 %v554, %v570
  %573 = vmatpush.msra.mxu0 0.0
  %574 = vmatpush.msra.mxu0 0.0
  %575 = vmatpush.msra.mxu0 0.0
  %576 = vmatpush.msra.mxu0 0.0
  %577 = vmatpush.msra.mxu0 0.0
  %578 = vmatpush.msra.mxu0 0.0
  %579 = vmatpush.msra.mxu0 0.0
  %580 = vmatpush.msra.mxu0 0.0
  %581 = vmatpush.msra.mxu0 0.0
  %582 = vmatpush.msra.mxu0 0.0
  %583 = vmatpush.msra.mxu0 0.0
  %584 = vmatpush.msra.mxu0 0.0
  %585 = vmatpush.msra.mxu0 %v49
  %586 = vmatpush.msra.mxu0 %v48
  %587 = vmatpush.msra.mxu0 %v47
  %588 = vmatpush.msra.mxu0 %v46
  %589 = vmatmul.f32.gmra.mxu0 %v488
  %v590 = vpop.f32.mrf.mxu0
  %v591 = vadd.f32 0.0, %v590
  %592 = vdwg.mxu0
  %v593 = vadd.f32 %v119, %v591
  %v594 = vxor.u32 %v593, 2147483648
  %v595 = vmul.f32 %v594, 1.442695
  %v596 = vpow.pop %v595
  %v597 = vadd.f32 %v596, 1.0
  %v598 = vrcp.pop %v597
  %v599 = vmul.f32 %v597, %v598
  %v600 = vsub.f32 1.0, %v599
  %v601 = vmul.f32 %v598, %v600
  %v602 = vadd.f32 %v598, %v601
  %vm603 = vweird.f32 %v597
  %vm604 = vweird.f32 %v598
  %vm605 = vmor %vm603, %vm604
  %v606 = vsel %vm605, %v598, %v602
  %v607 = vand.u32 2147483647, %v597
  %vm608 = vcmp.eq.f32.partialorder %v607, 8.507059e+37
  %v609 = vand.u32 %v597, 2147483648
  %v610 = vor.u32 1.1754944e-38, %v609
  %v611 = vsel %vm608, %v610, %v606
  %v612 = vmul.f32 1.0, %v611
  %v613 = vtanh.pop %v593
  %v614 = vmul.f32 %v612, %v478
  %616 = vrot.lane.b32.xlu0 %v613, 64
  %v617 = vpop.permute.xlu0 %616
  %v619 = vmul.f32 %v612, %v617
  %621 = vrot.lane.b32.xlu0 %v619, 32
  %v622 = vpop.permute.xlu0 %621
  %v624 = vadd.f32 %v614, %v622
  %v625 = vtanh.pop %v624
  %627 = vrot.lane.b32.xlu0 %v625, 64
  %v628 = vpop.permute.xlu0 %627
  %v630 = vmul.f32 %v612, %v628
  %632 = vrot.lane.b32.xlu0 %v630, 32
  %v633 = vpop.permute.xlu0 %632
  %v634 = vsel %vm133, %v633, 0
  %636 = vmatpush.msra.mxu0 0.0
  %637 = vmatpush.msra.mxu0 0.0
  %638 = vmatpush.msra.mxu0 0.0
  %639 = vmatpush.msra.mxu0 0.0
  %640 = vmatpush.msra.mxu0 0.0
  %641 = vmatpush.msra.mxu0 0.0
  %642 = vmatpush.msra.mxu0 0.0
  %643 = vmatpush.msra.mxu0 0.0
  %644 = vmatpush.msra.mxu0 0.0
  %645 = vmatpush.msra.mxu0 0.0
  %646 = vmatpush.msra.mxu0 0.0
  %647 = vmatpush.msra.mxu0 0.0
  %648 = vmatpush.msra.mxu0 %v45
  %649 = vmatpush.msra.mxu0 %v44
  %650 = vmatpush.msra.mxu0 %v43
  %651 = vmatpush.msra.mxu0 %v42
  %652 = vmatmul.f32.gmra.mxu0 %v634
  %v653 = vpop.f32.mrf.mxu0
  %v654 = vadd.f32 %v196, %v653
  %655 = vdwg.mxu0
  %657 = vrot.lane.b32.xlu0 %v572, 32
  %v658 = vpop.permute.xlu0 %657
  %v659 = vsel %vm133, %v658, 0
  %661 = vmatpush.msra.mxu0 0.0
  %662 = vmatpush.msra.mxu0 0.0
  %663 = vmatpush.msra.mxu0 0.0
  %664 = vmatpush.msra.mxu0 0.0
  %665 = vmatpush.msra.mxu0 0.0
  %666 = vmatpush.msra.mxu0 0.0
  %667 = vmatpush.msra.mxu0 0.0
  %668 = vmatpush.msra.mxu0 0.0
  %669 = vmatpush.msra.mxu0 0.0
  %670 = vmatpush.msra.mxu0 0.0
  %671 = vmatpush.msra.mxu0 0.0
  %672 = vmatpush.msra.mxu0 0.0
  %673 = vmatpush.msra.mxu0 %v53
  %674 = vmatpush.msra.mxu0 %v52
  %675 = vmatpush.msra.mxu0 %v51
  %676 = vmatpush.msra.mxu0 %v50
  %677 = vmatmul.f32.gmra.mxu0 %v659
  %v678 = vpop.f32.mrf.mxu0
  %v679 = vadd.f32 0.0, %v678
  %680 = vdwg.mxu0
  %v681 = vadd.f32 %v654, %v679
  %v682 = vxor.u32 %v681, 2147483648
  %v683 = vmul.f32 %v682, 1.442695
  %v684 = vpow.pop %v683
  %v685 = vadd.f32 %v684, 1.0
  %v686 = vrcp.pop %v685
  %v687 = vmul.f32 %v685, %v686
  %v688 = vsub.f32 1.0, %v687
  %v689 = vmul.f32 %v686, %v688
  %v690 = vadd.f32 %v686, %v689
  %vm691 = vweird.f32 %v685
  %vm692 = vweird.f32 %v686
  %vm693 = vmor %vm691, %vm692
  %v694 = vsel %vm693, %v686, %v690
  %v695 = vand.u32 2147483647, %v685
  %vm696 = vcmp.eq.f32.partialorder %v695, 8.507059e+37
  %v697 = vand.u32 %v685, 2147483648
  %v698 = vor.u32 1.1754944e-38, %v697
  %v699 = vsel %vm696, %v698, %v694
  %v700 = vmul.f32 1.0, %v699
  %v701 = vtanh.pop %v681
  %v702 = vmul.f32 %v700, %v566
  %704 = vrot.lane.b32.xlu0 %v701, 64
  %v705 = vpop.permute.xlu0 %704
  %v707 = vmul.f32 %v700, %v705
  %709 = vrot.lane.b32.xlu0 %v707, 32
  %v710 = vpop.permute.xlu0 %709
  %v712 = vadd.f32 %v702, %v710
  %v713 = vtanh.pop %v712
  %715 = vrot.lane.b32.xlu0 %v713, 64
  %v716 = vpop.permute.xlu0 %715
  %v718 = vmul.f32 %v700, %v716
  %719 = vmatpush.msra.mxu0 0.0
  %720 = vmatpush.msra.mxu0 0.0
  %721 = vmatpush.msra.mxu0 0.0
  %722 = vmatpush.msra.mxu0 0.0
  %723 = vmatpush.msra.mxu0 0.0
  %724 = vmatpush.msra.mxu0 0.0
  %725 = vmatpush.msra.mxu0 0.0
  %726 = vmatpush.msra.mxu0 0.0
  %727 = vmatpush.msra.mxu0 0.0
  %728 = vmatpush.msra.mxu0 0.0
  %729 = vmatpush.msra.mxu0 0.0
  %730 = vmatpush.msra.mxu0 0.0
  %731 = vmatpush.msra.mxu0 %v49
  %732 = vmatpush.msra.mxu0 %v48
  %733 = vmatpush.msra.mxu0 %v47
  %734 = vmatpush.msra.mxu0 %v46
  %735 = vmatmul.f32.gmra.mxu0 %v634
  %v736 = vpop.f32.mrf.mxu0
  %v737 = vadd.f32 0.0, %v736
  %738 = vdwg.mxu0
  %v739 = vadd.f32 %v122, %v737
  %v740 = vxor.u32 %v739, 2147483648
  %v741 = vmul.f32 %v740, 1.442695
  %v742 = vpow.pop %v741
  %v743 = vadd.f32 %v742, 1.0
  %v744 = vrcp.pop %v743
  %v745 = vmul.f32 %v743, %v744
  %v746 = vsub.f32 1.0, %v745
  %v747 = vmul.f32 %v744, %v746
  %v748 = vadd.f32 %v744, %v747
  %vm749 = vweird.f32 %v743
  %vm750 = vweird.f32 %v744
  %vm751 = vmor %vm749, %vm750
  %v752 = vsel %vm751, %v744, %v748
  %v753 = vand.u32 2147483647, %v743
  %vm754 = vcmp.eq.f32.partialorder %v753, 8.507059e+37
  %v755 = vand.u32 %v743, 2147483648
  %v756 = vor.u32 1.1754944e-38, %v755
  %v757 = vsel %vm754, %v756, %v752
  %v758 = vmul.f32 1.0, %v757
  %v759 = vtanh.pop %v739
  %v760 = vmul.f32 %v758, %v624
  %762 = vrot.lane.b32.xlu0 %v759, 64
  %v763 = vpop.permute.xlu0 %762
  %v765 = vmul.f32 %v758, %v763
  %767 = vrot.lane.b32.xlu0 %v765, 32
  %v768 = vpop.permute.xlu0 %767
  %v770 = vadd.f32 %v760, %v768
  %v771 = vtanh.pop %v770
  %773 = vrot.lane.b32.xlu0 %v771, 64
  %v774 = vpop.permute.xlu0 %773
  %v776 = vmul.f32 %v758, %v774
  %778 = vrot.lane.b32.xlu0 %v776, 32
  %v779 = vpop.permute.xlu0 %778
  %v780 = vsel %vm133, %v779, 0
  %782 = vmatpush.msra.mxu0 0.0
  %783 = vmatpush.msra.mxu0 0.0
  %784 = vmatpush.msra.mxu0 0.0
  %785 = vmatpush.msra.mxu0 0.0
  %786 = vmatpush.msra.mxu0 0.0
  %787 = vmatpush.msra.mxu0 0.0
  %788 = vmatpush.msra.mxu0 0.0
  %789 = vmatpush.msra.mxu0 0.0
  %790 = vmatpush.msra.mxu0 0.0
  %791 = vmatpush.msra.mxu0 0.0
  %792 = vmatpush.msra.mxu0 0.0
  %793 = vmatpush.msra.mxu0 0.0
  %794 = vmatpush.msra.mxu0 %v45
  %795 = vmatpush.msra.mxu0 %v44
  %796 = vmatpush.msra.mxu0 %v43
  %797 = vmatpush.msra.mxu0 %v42
  %798 = vmatmul.f32.gmra.mxu0 %v780
  %v799 = vpop.f32.mrf.mxu0
  %v800 = vadd.f32 %v196, %v799
  %801 = vdwg.mxu0
  %803 = vrot.lane.b32.xlu0 %v718, 32
  %v804 = vpop.permute.xlu0 %803
  %v805 = vsel %vm133, %v804, 0
  %807 = vmatpush.msra.mxu0 0.0
  %808 = vmatpush.msra.mxu0 0.0
  %809 = vmatpush.msra.mxu0 0.0
  %810 = vmatpush.msra.mxu0 0.0
  %811 = vmatpush.msra.mxu0 0.0
  %812 = vmatpush.msra.mxu0 0.0
  %813 = vmatpush.msra.mxu0 0.0
  %814 = vmatpush.msra.mxu0 0.0
  %815 = vmatpush.msra.mxu0 0.0
  %816 = vmatpush.msra.mxu0 0.0
  %817 = vmatpush.msra.mxu0 0.0
  %818 = vmatpush.msra.mxu0 0.0
  %819 = vmatpush.msra.mxu0 %v53
  %820 = vmatpush.msra.mxu0 %v52
  %821 = vmatpush.msra.mxu0 %v51
  %822 = vmatpush.msra.mxu0 %v50
  %823 = vmatmul.f32.gmra.mxu0 %v805
  %v824 = vpop.f32.mrf.mxu0
  %v825 = vadd.f32 0.0, %v824
  %826 = vdwg.mxu0
  %v827 = vadd.f32 %v800, %v825
  %v828 = vxor.u32 %v827, 2147483648
  %v829 = vmul.f32 %v828, 1.442695
  %v830 = vpow.pop %v829
  %v831 = vadd.f32 %v830, 1.0
  %v832 = vrcp.pop %v831
  %v833 = vmul.f32 %v831, %v832
  %v834 = vsub.f32 1.0, %v833
  %v835 = vmul.f32 %v832, %v834
  %v836 = vadd.f32 %v832, %v835
  %vm837 = vweird.f32 %v831
  %vm838 = vweird.f32 %v832
  %vm839 = vmor %vm837, %vm838
  %v840 = vsel %vm839, %v832, %v836
  %v841 = vand.u32 2147483647, %v831
  %vm842 = vcmp.eq.f32.partialorder %v841, 8.507059e+37
  %v843 = vand.u32 %v831, 2147483648
  %v844 = vor.u32 1.1754944e-38, %v843
  %v845 = vsel %vm842, %v844, %v840
  %v846 = vmul.f32 1.0, %v845
  %v847 = vtanh.pop %v827
  %v848 = vmul.f32 %v846, %v712
  %850 = vrot.lane.b32.xlu0 %v847, 64
  %v851 = vpop.permute.xlu0 %850
  %v853 = vmul.f32 %v846, %v851
  %855 = vrot.lane.b32.xlu0 %v853, 32
  %v856 = vpop.permute.xlu0 %855
  %v858 = vadd.f32 %v848, %v856
  %v859 = vtanh.pop %v858
  %861 = vrot.lane.b32.xlu0 %v859, 64
  %v862 = vpop.permute.xlu0 %861
  %v864 = vmul.f32 %v846, %v862
  %865 = vmatpush.msra.mxu0 0.0
  %866 = vmatpush.msra.mxu0 0.0
  %867 = vmatpush.msra.mxu0 0.0
  %868 = vmatpush.msra.mxu0 0.0
  %869 = vmatpush.msra.mxu0 0.0
  %870 = vmatpush.msra.mxu0 0.0
  %871 = vmatpush.msra.mxu0 0.0
  %872 = vmatpush.msra.mxu0 0.0
  %873 = vmatpush.msra.mxu0 0.0
  %874 = vmatpush.msra.mxu0 0.0
  %875 = vmatpush.msra.mxu0 0.0
  %876 = vmatpush.msra.mxu0 0.0
  %877 = vmatpush.msra.mxu0 %v49
  %878 = vmatpush.msra.mxu0 %v48
  %879 = vmatpush.msra.mxu0 %v47
  %880 = vmatpush.msra.mxu0 %v46
  %881 = vmatmul.f32.gmra.mxu0 %v780
  %v882 = vpop.f32.mrf.mxu0
  %v883 = vadd.f32 0.0, %v882
  %884 = vdwg.mxu0
  %v885 = vadd.f32 %v125, %v883
  %v886 = vxor.u32 %v885, 2147483648
  %v887 = vmul.f32 %v886, 1.442695
  %v888 = vpow.pop %v887
  %v889 = vadd.f32 %v888, 1.0
  %v890 = vrcp.pop %v889
  %v891 = vmul.f32 %v889, %v890
  %v892 = vsub.f32 1.0, %v891
  %v893 = vmul.f32 %v890, %v892
  %v894 = vadd.f32 %v890, %v893
  %vm895 = vweird.f32 %v889
  %vm896 = vweird.f32 %v890
  %vm897 = vmor %vm895, %vm896
  %v898 = vsel %vm897, %v890, %v894
  %v899 = vand.u32 2147483647, %v889
  %vm900 = vcmp.eq.f32.partialorder %v899, 8.507059e+37
  %v901 = vand.u32 %v889, 2147483648
  %v902 = vor.u32 1.1754944e-38, %v901
  %v903 = vsel %vm900, %v902, %v898
  %v904 = vmul.f32 1.0, %v903
  %v905 = vtanh.pop %v885
  %v906 = vmul.f32 %v904, %v770
  %908 = vrot.lane.b32.xlu0 %v905, 64
  %v909 = vpop.permute.xlu0 %908
  %v911 = vmul.f32 %v904, %v909
  %913 = vrot.lane.b32.xlu0 %v911, 32
  %v914 = vpop.permute.xlu0 %913
  %v916 = vadd.f32 %v906, %v914
  %v917 = vtanh.pop %v916
  %919 = vrot.lane.b32.xlu0 %v917, 64
  %v920 = vpop.permute.xlu0 %919
  %v922 = vmul.f32 %v904, %v920
  %924 = vrot.lane.b32.xlu0 %v922, 32
  %v925 = vpop.permute.xlu0 %924
  %v926 = vsel %vm133, %v925, 0
  %928 = vmatpush.msra.mxu0 0.0
  %929 = vmatpush.msra.mxu0 0.0
  %930 = vmatpush.msra.mxu0 0.0
  %931 = vmatpush.msra.mxu0 0.0
  %932 = vmatpush.msra.mxu0 0.0
  %933 = vmatpush.msra.mxu0 0.0
  %934 = vmatpush.msra.mxu0 0.0
  %935 = vmatpush.msra.mxu0 0.0
  %936 = vmatpush.msra.mxu0 0.0
  %937 = vmatpush.msra.mxu0 0.0
  %938 = vmatpush.msra.mxu0 0.0
  %939 = vmatpush.msra.mxu0 0.0
  %940 = vmatpush.msra.mxu0 %v45
  %941 = vmatpush.msra.mxu0 %v44
  %942 = vmatpush.msra.mxu0 %v43
  %943 = vmatpush.msra.mxu0 %v42
  %944 = vmatmul.f32.gmra.mxu0 %v926
  %v945 = vpop.f32.mrf.mxu0
  %v946 = vadd.f32 %v196, %v945
  %947 = vdwg.mxu0
  %949 = vrot.lane.b32.xlu0 %v864, 32
  %v950 = vpop.permute.xlu0 %949
  %v951 = vsel %vm133, %v950, 0
  %953 = vmatpush.msra.mxu0 0.0
  %954 = vmatpush.msra.mxu0 0.0
  %955 = vmatpush.msra.mxu0 0.0
  %956 = vmatpush.msra.mxu0 0.0
  %957 = vmatpush.msra.mxu0 0.0
  %958 = vmatpush.msra.mxu0 0.0
  %959 = vmatpush.msra.mxu0 0.0
  %960 = vmatpush.msra.mxu0 0.0
  %961 = vmatpush.msra.mxu0 0.0
  %962 = vmatpush.msra.mxu0 0.0
  %963 = vmatpush.msra.mxu0 0.0
  %964 = vmatpush.msra.mxu0 0.0
  %965 = vmatpush.msra.mxu0 %v53
  %966 = vmatpush.msra.mxu0 %v52
  %967 = vmatpush.msra.mxu0 %v51
  %968 = vmatpush.msra.mxu0 %v50
  %969 = vmatmul.f32.gmra.mxu0 %v951
  %v970 = vpop.f32.mrf.mxu0
  %v971 = vadd.f32 0.0, %v970
  %972 = vdwg.mxu0
  %v973 = vadd.f32 %v946, %v971
  %v974 = vxor.u32 %v973, 2147483648
  %v975 = vmul.f32 %v974, 1.442695
  %v976 = vpow.pop %v975
  %v977 = vadd.f32 %v976, 1.0
  %v978 = vrcp.pop %v977
  %v979 = vmul.f32 %v977, %v978
  %v980 = vsub.f32 1.0, %v979
  %v981 = vmul.f32 %v978, %v980
  %v982 = vadd.f32 %v978, %v981
  %vm983 = vweird.f32 %v977
  %vm984 = vweird.f32 %v978
  %vm985 = vmor %vm983, %vm984
  %v986 = vsel %vm985, %v978, %v982
  %v987 = vand.u32 2147483647, %v977
  %vm988 = vcmp.eq.f32.partialorder %v987, 8.507059e+37
  %v989 = vand.u32 %v977, 2147483648
  %v990 = vor.u32 1.1754944e-38, %v989
  %v991 = vsel %vm988, %v990, %v986
  %v992 = vmul.f32 1.0, %v991
  %v993 = vtanh.pop %v973
  %v994 = vmul.f32 %v992, %v858
  %996 = vrot.lane.b32.xlu0 %v993, 64
  %v997 = vpop.permute.xlu0 %996
  %v999 = vmul.f32 %v992, %v997
  %1001 = vrot.lane.b32.xlu0 %v999, 32
  %v1002 = vpop.permute.xlu0 %1001
  %v1004 = vadd.f32 %v994, %v1002
  %v1005 = vtanh.pop %v1004
  %1007 = vrot.lane.b32.xlu0 %v1005, 64
  %v1008 = vpop.permute.xlu0 %1007
  %v1010 = vmul.f32 %v992, %v1008
  %1011 = vmatpush.msra.mxu0 0.0
  %1012 = vmatpush.msra.mxu0 0.0
  %1013 = vmatpush.msra.mxu0 0.0
  %1014 = vmatpush.msra.mxu0 0.0
  %1015 = vmatpush.msra.mxu0 0.0
  %1016 = vmatpush.msra.mxu0 0.0
  %1017 = vmatpush.msra.mxu0 0.0
  %1018 = vmatpush.msra.mxu0 0.0
  %1019 = vmatpush.msra.mxu0 0.0
  %1020 = vmatpush.msra.mxu0 0.0
  %1021 = vmatpush.msra.mxu0 0.0
  %1022 = vmatpush.msra.mxu0 0.0
  %1023 = vmatpush.msra.mxu0 %v49
  %1024 = vmatpush.msra.mxu0 %v48
  %1025 = vmatpush.msra.mxu0 %v47
  %1026 = vmatpush.msra.mxu0 %v46
  %1027 = vmatmul.f32.gmra.mxu0 %v926
  %v1028 = vpop.f32.mrf.mxu0
  %v1029 = vadd.f32 0.0, %v1028
  %1030 = vdwg.mxu0
  %v1031 = vadd.f32 %v128, %v1029
  %v1032 = vxor.u32 %v1031, 2147483648
  %v1033 = vmul.f32 %v1032, 1.442695
  %v1034 = vpow.pop %v1033
  %v1035 = vadd.f32 %v1034, 1.0
  %v1036 = vrcp.pop %v1035
  %v1037 = vmul.f32 %v1035, %v1036
  %v1038 = vsub.f32 1.0, %v1037
  %v1039 = vmul.f32 %v1036, %v1038
  %v1040 = vadd.f32 %v1036, %v1039
  %vm1041 = vweird.f32 %v1035
  %vm1042 = vweird.f32 %v1036
  %vm1043 = vmor %vm1041, %vm1042
  %v1044 = vsel %vm1043, %v1036, %v1040
  %v1045 = vand.u32 2147483647, %v1035
  %vm1046 = vcmp.eq.f32.partialorder %v1045, 8.507059e+37
  %v1047 = vand.u32 %v1035, 2147483648
  %v1048 = vor.u32 1.1754944e-38, %v1047
  %v1049 = vsel %vm1046, %v1048, %v1044
  %v1050 = vmul.f32 1.0, %v1049
  %v1051 = vtanh.pop %v1031
  %v1052 = vmul.f32 %v1050, %v916
  %1054 = vrot.lane.b32.xlu0 %v1051, 64
  %v1055 = vpop.permute.xlu0 %1054
  %v1057 = vmul.f32 %v1050, %v1055
  %1059 = vrot.lane.b32.xlu0 %v1057, 32
  %v1060 = vpop.permute.xlu0 %1059
  %v1062 = vadd.f32 %v1052, %v1060
  %v1063 = vtanh.pop %v1062
  %1065 = vrot.lane.b32.xlu0 %v1063, 64
  %v1066 = vpop.permute.xlu0 %1065
  %v1068 = vmul.f32 %v1050, %v1066
  %1070 = vrot.lane.b32.xlu0 %v1068, 32
  %v1071 = vpop.permute.xlu0 %1070
  %v1072 = vsel %vm133, %v1071, 0
  %1074 = vmatpush.msra.mxu0 0.0
  %1075 = vmatpush.msra.mxu0 0.0
  %1076 = vmatpush.msra.mxu0 0.0
  %1077 = vmatpush.msra.mxu0 0.0
  %1078 = vmatpush.msra.mxu0 0.0
  %1079 = vmatpush.msra.mxu0 0.0
  %1080 = vmatpush.msra.mxu0 0.0
  %1081 = vmatpush.msra.mxu0 0.0
  %1082 = vmatpush.msra.mxu0 0.0
  %1083 = vmatpush.msra.mxu0 0.0
  %1084 = vmatpush.msra.mxu0 0.0
  %1085 = vmatpush.msra.mxu0 0.0
  %1086 = vmatpush.msra.mxu0 %v45
  %1087 = vmatpush.msra.mxu0 %v44
  %1088 = vmatpush.msra.mxu0 %v43
  %1089 = vmatpush.msra.mxu0 %v42
  %1090 = vmatmul.f32.gmra.mxu0 %v1072
  %v1091 = vpop.f32.mrf.mxu0
  %v1092 = vadd.f32 %v196, %v1091
  %1093 = vdwg.mxu0
  %1095 = vrot.lane.b32.xlu0 %v1010, 32
  %v1096 = vpop.permute.xlu0 %1095
  %v1097 = vsel %vm133, %v1096, 0
  %1099 = vmatpush.msra.mxu0 0.0
  %1100 = vmatpush.msra.mxu0 0.0
  %1101 = vmatpush.msra.mxu0 0.0
  %1102 = vmatpush.msra.mxu0 0.0
  %1103 = vmatpush.msra.mxu0 0.0
  %1104 = vmatpush.msra.mxu0 0.0
  %1105 = vmatpush.msra.mxu0 0.0
  %1106 = vmatpush.msra.mxu0 0.0
  %1107 = vmatpush.msra.mxu0 0.0
  %1108 = vmatpush.msra.mxu0 0.0
  %1109 = vmatpush.msra.mxu0 0.0
  %1110 = vmatpush.msra.mxu0 0.0
  %1111 = vmatpush.msra.mxu0 %v53
  %1112 = vmatpush.msra.mxu0 %v52
  %1113 = vmatpush.msra.mxu0 %v51
  %1114 = vmatpush.msra.mxu0 %v50
  %1115 = vmatmul.f32.gmra.mxu0 %v1097
  %v1116 = vpop.f32.mrf.mxu0
  %v1117 = vadd.f32 0.0, %v1116
  %1118 = vdwg.mxu0
  %v1119 = vadd.f32 %v1092, %v1117
  %v1120 = vxor.u32 %v1119, 2147483648
  %v1121 = vmul.f32 %v1120, 1.442695
  %v1122 = vpow.pop %v1121
  %v1123 = vadd.f32 %v1122, 1.0
  %v1124 = vrcp.pop %v1123
  %v1125 = vmul.f32 %v1123, %v1124
  %v1126 = vsub.f32 1.0, %v1125
  %v1127 = vmul.f32 %v1124, %v1126
  %v1128 = vadd.f32 %v1124, %v1127
  %vm1129 = vweird.f32 %v1123
  %vm1130 = vweird.f32 %v1124
  %vm1131 = vmor %vm1129, %vm1130
  %v1132 = vsel %vm1131, %v1124, %v1128
  %v1133 = vand.u32 2147483647, %v1123
  %vm1134 = vcmp.eq.f32.partialorder %v1133, 8.507059e+37
  %v1135 = vand.u32 %v1123, 2147483648
  %v1136 = vor.u32 1.1754944e-38, %v1135
  %v1137 = vsel %vm1134, %v1136, %v1132
  %v1138 = vmul.f32 1.0, %v1137
  %v1139 = vtanh.pop %v1119
  %v1140 = vmul.f32 %v1138, %v1004
  %1142 = vrot.lane.b32.xlu0 %v1139, 64
  %v1143 = vpop.permute.xlu0 %1142
  %v1145 = vmul.f32 %v1138, %v1143
  %1147 = vrot.lane.b32.xlu0 %v1145, 32
  %v1148 = vpop.permute.xlu0 %1147
  %v1150 = vadd.f32 %v1140, %v1148
  %v1151 = vtanh.pop %v1150
  %1153 = vrot.lane.b32.xlu0 %v1151, 64
  %v1154 = vpop.permute.xlu0 %1153
  %v1156 = vmul.f32 %v1138, %v1154
  %1157 = vmatpush.msra.mxu0 0.0
  %1158 = vmatpush.msra.mxu0 0.0
  %1159 = vmatpush.msra.mxu0 0.0
  %1160 = vmatpush.msra.mxu0 0.0
  %1161 = vmatpush.msra.mxu0 0.0
  %1162 = vmatpush.msra.mxu0 0.0
  %1163 = vmatpush.msra.mxu0 0.0
  %1164 = vmatpush.msra.mxu0 0.0
  %1165 = vmatpush.msra.mxu0 0.0
  %1166 = vmatpush.msra.mxu0 0.0
  %1167 = vmatpush.msra.mxu0 0.0
  %1168 = vmatpush.msra.mxu0 0.0
  %1169 = vmatpush.msra.mxu0 %v49
  %1170 = vmatpush.msra.mxu0 %v48
  %1171 = vmatpush.msra.mxu0 %v47
  %1172 = vmatpush.msra.mxu0 %v46
  %1173 = vmatmul.f32.gmra.mxu0 %v1072
  %v1174 = vpop.f32.mrf.mxu0
  %v1175 = vadd.f32 0.0, %v1174
  %1176 = vdwg.mxu0
  %v1177 = vadd.f32 %v131, %v1175
  %v1178 = vxor.u32 %v1177, 2147483648
  %v1179 = vmul.f32 %v1178, 1.442695
  %v1180 = vpow.pop %v1179
  %v1181 = vadd.f32 %v1180, 1.0
  %v1182 = vrcp.pop %v1181
  %v1183 = vmul.f32 %v1181, %v1182
  %v1184 = vsub.f32 1.0, %v1183
  %v1185 = vmul.f32 %v1182, %v1184
  %v1186 = vadd.f32 %v1182, %v1185
  %vm1187 = vweird.f32 %v1181
  %vm1188 = vweird.f32 %v1182
  %vm1189 = vmor %vm1187, %vm1188
  %v1190 = vsel %vm1189, %v1182, %v1186
  %v1191 = vand.u32 2147483647, %v1181
  %vm1192 = vcmp.eq.f32.partialorder %v1191, 8.507059e+37
  %v1193 = vand.u32 %v1181, 2147483648
  %v1194 = vor.u32 1.1754944e-38, %v1193
  %v1195 = vsel %vm1192, %v1194, %v1190
  %v1196 = vmul.f32 1.0, %v1195
  %v1197 = vtanh.pop %v1177
  %v1198 = vmul.f32 %v1196, %v1062
  %1200 = vrot.lane.b32.xlu0 %v1197, 64
  %v1201 = vpop.permute.xlu0 %1200
  %v1203 = vmul.f32 %v1196, %v1201
  %1205 = vrot.lane.b32.xlu0 %v1203, 32
  %v1206 = vpop.permute.xlu0 %1205
  %v1208 = vadd.f32 %v1198, %v1206
  %v1209 = vtanh.pop %v1208
  %1211 = vrot.lane.b32.xlu0 %v1209, 64
  %v1212 = vpop.permute.xlu0 %1211
  %v1214 = vmul.f32 %v1196, %v1212
  %1216 = vrot.lane.b32.xlu0 %v1214, 32
  %v1217 = vpop.permute.xlu0 %1216
  %v1218 = vsel %vm133, %v1217, 0
  %1220 = vmatpush.msra.mxu0 0.0
  %1221 = vmatpush.msra.mxu0 0.0
  %1222 = vmatpush.msra.mxu0 0.0
  %1223 = vmatpush.msra.mxu0 0.0
  %1224 = vmatpush.msra.mxu0 0.0
  %1225 = vmatpush.msra.mxu0 0.0
  %1226 = vmatpush.msra.mxu0 0.0
  %1227 = vmatpush.msra.mxu0 0.0
  %1228 = vmatpush.msra.mxu0 0.0
  %1229 = vmatpush.msra.mxu0 0.0
  %1230 = vmatpush.msra.mxu0 0.0
  %1231 = vmatpush.msra.mxu0 0.0
  %1232 = vmatpush.msra.mxu0 %v45
  %1233 = vmatpush.msra.mxu0 %v44
  %1234 = vmatpush.msra.mxu0 %v43
  %1235 = vmatpush.msra.mxu0 %v42
  %1236 = vmatmul.f32.gmra.mxu0 %v1218
  %v1237 = vpop.f32.mrf.mxu0
  %v1238 = vadd.f32 %v196, %v1237
  %1239 = vdwg.mxu0
  %1241 = vrot.lane.b32.xlu0 %v1156, 32
  %v1242 = vpop.permute.xlu0 %1241
  %v1243 = vsel %vm133, %v1242, 0
  %1245 = vmatpush.msra.mxu0 0.0
  %1246 = vmatpush.msra.mxu0 0.0
  %1247 = vmatpush.msra.mxu0 0.0
  %1248 = vmatpush.msra.mxu0 0.0
  %1249 = vmatpush.msra.mxu0 0.0
  %1250 = vmatpush.msra.mxu0 0.0
  %1251 = vmatpush.msra.mxu0 0.0
  %1252 = vmatpush.msra.mxu0 0.0
  %1253 = vmatpush.msra.mxu0 0.0
  %1254 = vmatpush.msra.mxu0 0.0
  %1255 = vmatpush.msra.mxu0 0.0
  %1256 = vmatpush.msra.mxu0 0.0
  %1257 = vmatpush.msra.mxu0 %v53
  %1258 = vmatpush.msra.mxu0 %v52
  %1259 = vmatpush.msra.mxu0 %v51
  %1260 = vmatpush.msra.mxu0 %v50
  %1261 = vmatmul.f32.gmra.mxu0 %v1243
  %v1262 = vpop.f32.mrf.mxu0
  %v1263 = vadd.f32 0.0, %v1262
  %1264 = vdwg.mxu0
  %v1265 = vadd.f32 %v1238, %v1263
  %v1266 = vxor.u32 %v1265, 2147483648
  %v1267 = vmul.f32 %v1266, 1.442695
  %v1268 = vpow.pop %v1267
  %v1269 = vadd.f32 %v1268, 1.0
  %v1270 = vrcp.pop %v1269
  %v1271 = vmul.f32 %v1269, %v1270
  %v1272 = vsub.f32 1.0, %v1271
  %v1273 = vmul.f32 %v1270, %v1272
  %v1274 = vadd.f32 %v1270, %v1273
  %vm1275 = vweird.f32 %v1269
  %vm1276 = vweird.f32 %v1270
  %vm1277 = vmor %vm1275, %vm1276
  %v1278 = vsel %vm1277, %v1270, %v1274
  %v1279 = vand.u32 2147483647, %v1269
  %vm1280 = vcmp.eq.f32.partialorder %v1279, 8.507059e+37
  %v1281 = vand.u32 %v1269, 2147483648
  %v1282 = vor.u32 1.1754944e-38, %v1281
  %v1283 = vsel %vm1280, %v1282, %v1278
  %v1284 = vmul.f32 1.0, %v1283
  %v1285 = vtanh.pop %v1265
  %v1286 = vmul.f32 %v1284, %v1150
  %1288 = vrot.lane.b32.xlu0 %v1285, 64
  %v1289 = vpop.permute.xlu0 %1288
  %v1291 = vmul.f32 %v1284, %v1289
  %1293 = vrot.lane.b32.xlu0 %v1291, 32
  %v1294 = vpop.permute.xlu0 %1293
  %v1296 = vadd.f32 %v1286, %v1294
  %v1297 = vtanh.pop %v1296
  %1299 = vrot.lane.b32.xlu0 %v1297, 64
  %v1300 = vpop.permute.xlu0 %1299
  %v1302 = vmul.f32 %v1284, %v1300
  %v1303 = vld [vmem:[%s7] sm:$0xff]
  %v1304 = vld [vmem:[%s7 + $0x8] sm:$0xff]
  %v1305 = vld [vmem:[%s7 + $0x10] sm:$0xff]
  %v1306 = vld [vmem:[%s7 + $0x18] sm:$0xff]
  %v1307 = vld [vmem:[%s8] sm:$0x1]
  %v1309 = vperm.slane %v1307, 0
  %1312 = vrot.lane.b32.xlu0 %v1302, 32
  %v1313 = vpop.permute.xlu0 %1312
  %v1314 = vsel %vm133, %v1313, 0
  %1316 = vmatpush.msra.mxu0 0.0
  %1317 = vmatpush.msra.mxu0 0.0
  %1318 = vmatpush.msra.mxu0 0.0
  %1319 = vmatpush.msra.mxu0 0.0
  %1320 = vmatpush.msra.mxu0 0.0
  %1321 = vmatpush.msra.mxu0 0.0
  %1322 = vmatpush.msra.mxu0 0.0
  %1323 = vmatpush.msra.mxu0 0.0
  %1324 = vmatpush.msra.mxu0 0.0
  %1325 = vmatpush.msra.mxu0 0.0
  %1326 = vmatpush.msra.mxu0 0.0
  %1327 = vmatpush.msra.mxu0 0.0
  %1328 = vmatpush.msra.mxu0 %v1306
  %1329 = vmatpush.msra.mxu0 %v1305
  %1330 = vmatpush.msra.mxu0 %v1304
  %1331 = vmatpush.msra.mxu0 %v1303
  %1332 = vmatmul.f32.gmra.mxu0 %v1314
  %v1333 = vpop.f32.mrf.mxu0
  %v1334 = vadd.f32 %v1309, %v1333
  %1335 = vdwg.mxu0
  %v1336 = vmax.f32 %v1334, 0.0
  %v1337 = vld [vmem:[%s9] sm:$0xff]
  %v1338 = vld [vmem:[%s9 + $0x8] sm:$0xff]
  %v1339 = vld [vmem:[%s9 + $0x10] sm:$0xff]
  %v1340 = vld [vmem:[%s9 + $0x18] sm:$0xff]
  %v1341 = vld [vmem:[%s9 + $0x20] sm:$0xff]
  %v1342 = vld [vmem:[%s9 + $0x28] sm:$0xff]
  %v1343 = vld [vmem:[%s9 + $0x30] sm:$0xff]
  %v1344 = vld [vmem:[%s9 + $0x38] sm:$0xff]
  %v1345 = vld [vmem:[#allocation2] sm:$0x1]
  %v1347 = vperm.slane %v1345, 0
  %vm1349 = vcmask 523264
  %v1351 = vsel %vm1349, %v1336, 0
  %1353 = vmatpush.msra.mxu0 0.0
  %1354 = vmatpush.msra.mxu0 0.0
  %1355 = vmatpush.msra.mxu0 0.0
  %1356 = vmatpush.msra.mxu0 0.0
  %1357 = vmatpush.msra.mxu0 0.0
  %1358 = vmatpush.msra.mxu0 0.0
  %1359 = vmatpush.msra.mxu0 0.0
  %1360 = vmatpush.msra.mxu0 0.0
  %1361 = vmatpush.msra.mxu0 %v1344
  %1362 = vmatpush.msra.mxu0 %v1343
  %1363 = vmatpush.msra.mxu0 %v1342
  %1364 = vmatpush.msra.mxu0 %v1341
  %1365 = vmatpush.msra.mxu0 %v1340
  %1366 = vmatpush.msra.mxu0 %v1339
  %1367 = vmatpush.msra.mxu0 %v1338
  %1368 = vmatpush.msra.mxu0 %v1337
  %1369 = vmatmul.f32.gmra.mxu0 %v1351
  %v1370 = vpop.f32.mrf.mxu0
  %v1371 = vadd.f32 %v1347, %v1370
  %1372 = vdwg.mxu0
  %v1373 = vmax.f32 %v1371, 0.0
  %vm1374 = vcmask 7168
  %1375 = vst.msk [vmem:[%s11] sm:$0xff] %vm1374, %v1373
  // Predicated region
  $region46: #{lstm_model_forward.1} parent=0 // pred_check
    _
  $region47: #{lstm_model_forward.1} parent=0 // pred_check_branch
    %1377 = sbr.rel (0) target = $region49
  $region48: #{lstm_model_forward.1} parent=0 // pred_region
    _
  $region49: #{lstm_model_forward.1} parent=0 // pred_fallthru
    _
  // Predicated region
  $region50: #{lstm_model_forward.1} parent=0 // pred_check
    _
  $region51: #{lstm_model_forward.1} parent=0 // pred_check_branch
    %1379 = sbr.rel (0) target = $region53
  $region52: #{lstm_model_forward.1} parent=0 // pred_region
    _
  $region53: #{lstm_model_forward.1} parent=0 // pred_fallthru
    _

</llo_original>
